<compile_context>
chip_gen: v5e
topology: v5e:2x2
jax: 0.10.0
libtpu: 0.0.40
codegen_flags: <defaults>
</compile_context>

<pallas_src>
import functools
import numpy as np
import jax
import jax.numpy as jnp
from jax import lax
from jax.experimental import pallas as pl
from jax.experimental.pallas import tpu as pltpu

LN_EPS = 1e-5  # torch.nn.LayerNorm default


# --------------------------------------------------------------------------- kernel
def _make_kernel(N, c_z, c, n_head, block_j):
    cH = c * n_head

    def kernel(zr_ref, zc_ref, lng_ref, lnb_ref, wrow_ref, wcol_ref, wo_ref,
               o_ref, kb_scr, v_scr):
        f32 = jnp.float32
        jb = pl.program_id(2)

        gamma = lng_ref[...].astype(f32)          # (1, c_z)
        beta = lnb_ref[...].astype(f32)           # (1, c_z)

        def layer_norm(x):
            mu = jnp.mean(x, axis=-1, keepdims=True)
            var = jnp.mean(jnp.square(x - mu), axis=-1, keepdims=True)
            return (x - mu) * lax.rsqrt(var + LN_EPS) * gamma + beta

        # ---- column path: keys / values / per-key bias, computed ONCE per (b, i)
        # (j-tile 0).  Scratch persists across the j axis ("arbitrary").
        @pl.when(jb == 0)
        def _():
            zc = layer_norm(zc_ref[0, 0].astype(f32))                  # (N, c_z)
            kvb = jnp.dot(zc, wcol_ref[...].astype(f32),
                          preferred_element_type=f32)                  # (N, cH + H*(c+1))
            v_scr[...] = kvb[:, :cH]                                   # (N, cH)
            kb_scr[...] = kvb[:, cH:]                                  # (N, H*(c+1))

        # ---- row path: queries / output gates for this tile of j
        zr = layer_norm(zr_ref[0, 0].astype(f32))                      # (TJ, c_z)
        qg = jnp.dot(zr, wrow_ref[...].astype(f32),
                     preferred_element_type=f32)                       # (TJ, 2*cH)
        q = qg[:, :cH]                          # 1/sqrt(c) already folded into Wq
        gate = jax.nn.sigmoid(qg[:, cH:])       # one EUP/VPU pass for all heads

        kb = kb_scr[...]                        # per head layout: [K_h (c) | bias_h (1)]
        vv = v_scr[...]
        ones = jnp.ones((block_j, 1), f32)      # pairs with the bias column of K

        outs = []
        for h in range(n_head):                 # n_head is small; unrolled Python loop
            q_aug = jnp.concatenate([q[:, h * c:(h + 1) * c], ones], axis=1)   # (TJ, c+1)
            k_aug = kb[:, h * (c + 1):(h + 1) * (c + 1)]                        # (N, c+1)
            # s[j,k] = scale*<q_h[j], k_h[k]> + bias_h[k]   (bias folded into the matmul)
            s = lax.dot_general(q_aug, k_aug, (((1,), (1,)), ((), ())),
                                preferred_element_type=f32)                     # (TJ, N)
            s = s - jnp.max(s, axis=-1, keepdims=True)
            p = jnp.exp(s)
            p = p * pl.reciprocal(jnp.sum(p, axis=-1, keepdims=True), approx=True)
            oh = jnp.dot(p, vv[:, h * c:(h + 1) * c],
                         preferred_element_type=f32)                            # (TJ, c)
            outs.append(gate[:, h * c:(h + 1) * c] * oh)

        # single (TJ, cH) @ (cH, c_z) matmul keeps the MXU contraction deep
        o = jnp.concatenate(outs, axis=1)                                       # (TJ, cH)
        o_ref[0, 0] = jnp.dot(o, wo_ref[...].astype(f32),
                              preferred_element_type=f32).astype(o_ref.dtype)

    return kernel


# --------------------------------------------------------------------------- wrapper
def triangle_attention_ending_node(params, z_ij, *, c=32, n_head=4, block_j=None):
    """Pallas forward of TriangleAttentionEndingNode.  z_ij: (B, N, N, c_z)."""
    B, N, N2, c_z = z_ij.shape
    assert N == N2, "pair representation must be square"
    cH = c * n_head

    if block_j is None:
        # Per-step VMEM is O(N * channels) for the K/V scratch plus per-head
        # (block_j, N) score tiles; 256 query rows amortizes the ~0.35us/step
        # grid overhead while staying v7x(64 MiB)-safe for realistic N.
        block_j = N if N <= 256 else 256

    # ---- host-side weight fusion (torch (out, in) -> (in, out) layout) ----
    w1 = jnp.asarray(params["w1"], jnp.float32)               # (3*cH, c_z)
    wq = w1[:cH, :].T * (1.0 / np.sqrt(c))                    # fold softmax scale into Wq
    wk = w1[cH:2 * cH, :].T
    wv = w1[2 * cH:, :].T
    wb = jnp.asarray(params["w2"], jnp.float32).T             # (c_z, H)
    wg = jnp.asarray(params["w3"], jnp.float32).T             # (c_z, cH)
    wo = jnp.asarray(params["w4"], jnp.float32).T             # (cH, c_z)

    w_row = jnp.concatenate([wq, wg], axis=1)                 # (c_z, 2*cH): [Q | G]
    cols = [wv]                                               # [V | K_0 b_0 | K_1 b_1 | ...]
    for h in range(n_head):
        cols.append(wk[:, h * c:(h + 1) * c])
        cols.append(wb[:, h:h + 1])
    w_col = jnp.concatenate(cols, axis=1)                     # (c_z, cH + H*(c+1))

    ln_g = jnp.asarray(params["ln_w"], jnp.float32).reshape(1, c_z)
    ln_b = jnp.asarray(params["ln_b"], jnp.float32).reshape(1, c_z)

    # Transposed view of z so the ending-node key/value column z[b, :, i, :]
    # is a contiguous row block that BlockSpec can stream.
    z_t = jnp.transpose(z_ij, (0, 2, 1, 3))

    kernel = _make_kernel(N, c_z, c, n_head, block_j)
    grid = (B, N, pl.cdiv(N, block_j))

    # Advisory cost estimate for XLA's scheduler around the custom call.
    itemsize = jnp.dtype(z_ij.dtype).itemsize
    flops = int(2 * B * N * N * (c_z * (4 * cH + n_head)          # projections
                                 + 2 * n_head * c * N             # QK^T and AV
                                 + cH * c_z))                     # output proj
    transcendentals = int(B * N * N * (n_head * N + cH))          # exp + sigmoid
    bytes_accessed = int(3 * B * N * N * c_z * itemsize)          # z, z_t, out

    return pl.pallas_call(
        kernel,
        out_shape=jax.ShapeDtypeStruct((B, N, N, c_z), z_ij.dtype),
        grid_spec=pltpu.PrefetchScalarGridSpec(
            num_scalar_prefetch=0,
            grid=grid,
            in_specs=[
                # row i, query tile j of z
                pl.BlockSpec((1, 1, block_j, c_z), lambda b, i, j: (b, i, j, 0)),
                # column i of z (constant across j -> fetched once per (b, i))
                pl.BlockSpec((1, 1, N, c_z), lambda b, i, j: (b, i, 0, 0)),
                pl.BlockSpec((1, c_z), lambda b, i, j: (0, 0)),      # LN gamma
                pl.BlockSpec((1, c_z), lambda b, i, j: (0, 0)),      # LN beta
                pl.BlockSpec((c_z, 2 * cH), lambda b, i, j: (0, 0)),               # W_row
                pl.BlockSpec((c_z, cH + n_head * (c + 1)), lambda b, i, j: (0, 0)),  # W_col
                pl.BlockSpec((cH, c_z), lambda b, i, j: (0, 0)),                   # W_out
            ],
            out_specs=pl.BlockSpec((1, 1, block_j, c_z), lambda b, i, j: (b, i, j, 0)),
            scratch_shapes=[
                pltpu.VMEM((N, n_head * (c + 1)), jnp.float32),   # per-head [K | bias]
                pltpu.VMEM((N, cH), jnp.float32),                 # V
            ],
        ),
        compiler_params=pltpu.CompilerParams(
            # outer axes shard across TensorCores; j carries the kv scratch.
            dimension_semantics=("parallel", "parallel", "arbitrary")),
        cost_estimate=pl.CostEstimate(flops=flops,
                                      transcendentals=transcendentals,
                                      bytes_accessed=bytes_accessed),
    )(z_ij, z_t, ln_g, ln_b, w_row, w_col, wo)


# --------------------------------------------------------------------------- pure-JAX reference (literal translation of the torch code)
def reference_forward(params, z, *, c=32, n_head=4):
    B, N, _, c_z = z.shape
    cH = c * n_head
    mu = jnp.mean(z, axis=-1, keepdims=True)
    var = jnp.mean(jnp.square(z - mu), axis=-1, keepdims=True)
    zl = (z - mu) * lax.rsqrt(var + LN_EPS) * params["ln_w"] + params["ln_b"]

    qkv = zl @ params["w1"].T
    qh = jnp.transpose(qkv[..., :cH].reshape(B, N, N, n_head, c), (0, 3, 1, 2, 4))
    kh = jnp.transpose(qkv[..., cH:2 * cH].reshape(B, N, N, n_head, c), (0, 3, 1, 2, 4))
    vh = jnp.transpose(qkv[..., 2 * cH:].reshape(B, N, N, n_head, c), (0, 3, 1, 2, 4))
    bh = jnp.transpose((zl @ params["w2"].T).reshape(B, N, N, n_head), (0, 3, 1, 2))
    gh = jnp.transpose(jax.nn.sigmoid(zl @ params["w3"].T).reshape(B, N, N, n_head, c),
                       (0, 3, 1, 2, 4))

    kt = jnp.swapaxes(jnp.swapaxes(kh, -2, -3), -1, -2)
    logits = (1.0 / np.sqrt(c)) * jnp.matmul(qh, kt) \
        + jnp.swapaxes(bh, -1, -2)[:, :, :, None]
    a = jax.nn.softmax(logits, axis=-1)
    oh = gh * jnp.matmul(a, jnp.swapaxes(vh, 2, 3))
    o = jnp.transpose(oh, (0, 2, 3, 1, 4)).reshape(B, N, N, cH)
    return o @ params["w4"].T


# --------------------------------------------------------------------------- params
def init_params(key, c_z, c=32, n_head=4, scale=0.05):
    ks = jax.random.split(key, 6)
    cH = c * n_head
    return {
        "ln_w": 1.0 + 0.1 * jax.random.normal(ks[0], (c_z,), jnp.float32),
        "ln_b": 0.05 * jax.random.normal(ks[1], (c_z,), jnp.float32),
        "w1": scale * jax.random.normal(ks[2], (3 * cH, c_z), jnp.float32),
        "w2": scale * jax.random.normal(ks[3], (n_head, c_z), jnp.float32),
        "w3": scale * jax.random.normal(ks[4], (cH, c_z), jnp.float32),
        "w4": scale * jax.random.normal(ks[5], (c_z, cH), jnp.float32),
    }


# --------------------------------------------------------------------------- demo
if __name__ == "__main__":
    B, N_token, c_z = 2, 16, 128           # module defaults: c=32, N_head=4 -> c*H=128
    C, H = 32, 4

    root = jax.random.PRNGKey(0)
    pkey, zkey = jax.random.split(root)
    params = init_params(pkey, c_z, C, H)
    z_ij = jax.random.normal(zkey, (B, N_token, N_token, c_z), jnp.float32)

    fwd = jax.jit(functools.partial(triangle_attention_ending_node, c=C, n_head=H))
    out = jax.block_until_ready(fwd(params, z_ij))

    assert out.shape == (B, N_token, N_token, c_z)
    if not bool(jnp.all(jnp.isfinite(out))):
        raise RuntimeError("non-finite values in kernel output")

    ref = reference_forward(params, z_ij, c=C, n_head=H)
    np.testing.assert_allclose(np.asarray(out), np.asarray(ref), rtol=5e-2, atol=5e-2)

    print("KERNEL_OK")
</pallas_src>

<mosaic_0001>
module attributes {stable_mosaic.version = 11 : i64} {
  func.func @kernel(%arg0: i32, %arg1: i32, %arg2: i32, %arg3: memref<1x1x16x128xf32, #tpu.memory_space<vmem>>, %arg4: memref<1x1x16x128xf32, #tpu.memory_space<vmem>>, %arg5: memref<1x128xf32, #tpu.memory_space<vmem>>, %arg6: memref<1x128xf32, #tpu.memory_space<vmem>>, %arg7: memref<128x256xf32, #tpu.memory_space<vmem>>, %arg8: memref<128x260xf32, #tpu.memory_space<vmem>>, %arg9: memref<128x128xf32, #tpu.memory_space<vmem>>, %arg10: memref<1x1x16x128xf32, #tpu.memory_space<vmem>>, %arg11: memref<16x132xf32, #tpu.memory_space<vmem>>, %arg12: memref<16x128xf32, #tpu.memory_space<vmem>>) attributes {dimension_semantics = [#tpu.dimension_semantics<parallel>, #tpu.dimension_semantics<parallel>, #tpu.dimension_semantics<arbitrary>], iteration_bounds = array<i64: 2, 16, 1>, scalar_prefetch = 0 : i64, scratch_operands = 2 : i64, tpu.core_type = #tpu.core_type<tc>, window_params = [{transform_indices = @transform_0, window_bounds = array<i64: 1, 1, 16, 128>}, {transform_indices = @transform_1, window_bounds = array<i64: 1, 1, 16, 128>}, {pipeline_mode = #tpu.pipeline_mode<synchronous>, transform_indices = @transform_2, window_bounds = array<i64: 1, 128>}, {pipeline_mode = #tpu.pipeline_mode<synchronous>, transform_indices = @transform_3, window_bounds = array<i64: 1, 128>}, {pipeline_mode = #tpu.pipeline_mode<synchronous>, transform_indices = @transform_4, window_bounds = array<i64: 128, 256>}, {pipeline_mode = #tpu.pipeline_mode<synchronous>, transform_indices = @transform_5, window_bounds = array<i64: 128, 260>}, {pipeline_mode = #tpu.pipeline_mode<synchronous>, transform_indices = @transform_6, window_bounds = array<i64: 128, 128>}, {transform_indices = @transform_7, window_bounds = array<i64: 1, 1, 16, 128>}]} {
    %c0 = arith.constant 0 : index
    %c0_0 = arith.constant 0 : index
    %0 = vector.load %arg5[%c0, %c0_0] : memref<1x128xf32, #tpu.memory_space<vmem>>, vector<1x128xf32>
    %c0_1 = arith.constant 0 : index
    %c0_2 = arith.constant 0 : index
    %1 = vector.load %arg6[%c0_1, %c0_2] : memref<1x128xf32, #tpu.memory_space<vmem>>, vector<1x128xf32>
    %c0_i32 = arith.constant 0 : i32
    %2 = arith.cmpi eq, %arg2, %c0_i32 : i32
    %3 = arith.extui %2 : i1 to i32
    %c0_i32_3 = arith.constant 0 : i32
    %4 = arith.cmpi ne, %3, %c0_i32_3 : i32
    scf.if %4 {
      %c0_44 = arith.constant 0 : index
      %c0_45 = arith.constant 0 : index
      %c0_46 = arith.constant 0 : index
      %c0_47 = arith.constant 0 : index
      %119 = vector.load %arg4[%c0_44, %c0_45, %c0_46, %c0_47] : memref<1x1x16x128xf32, #tpu.memory_space<vmem>>, vector<1x1x16x128xf32>
      %120 = vector.shape_cast %119 : vector<1x1x16x128xf32> to vector<16x128xf32>
      %cst_48 = arith.constant dense<0.000000e+00> : vector<16xf32>
      %121 = vector.multi_reduction <add>, %120, %cst_48 [1] : vector<16x128xf32> to vector<16xf32>
      %122 = vector.shape_cast %121 : vector<16xf32> to vector<16x1xf32>
      %cst_49 = arith.constant 1.280000e+02 : f32
      %123 = vector.broadcast %cst_49 : f32 to vector<16x1xf32>
      %124 = arith.divf %122, %123 : vector<16x1xf32>
      %125 = vector.broadcast %124 : vector<16x1xf32> to vector<16x128xf32>
      %126 = arith.subf %120, %125 : vector<16x128xf32>
      %127 = arith.mulf %126, %126 : vector<16x128xf32>
      %cst_50 = arith.constant dense<0.000000e+00> : vector<16xf32>
      %128 = vector.multi_reduction <add>, %127, %cst_50 [1] : vector<16x128xf32> to vector<16xf32>
      %129 = vector.shape_cast %128 : vector<16xf32> to vector<16x1xf32>
      %cst_51 = arith.constant 1.280000e+02 : f32
      %130 = vector.broadcast %cst_51 : f32 to vector<16x1xf32>
      %131 = arith.divf %129, %130 : vector<16x1xf32>
      %132 = vector.broadcast %124 : vector<16x1xf32> to vector<16x128xf32>
      %133 = arith.subf %120, %132 : vector<16x128xf32>
      %cst_52 = arith.constant 9.99999974E-6 : f32
      %134 = vector.broadcast %cst_52 : f32 to vector<16x1xf32>
      %135 = arith.addf %131, %134 : vector<16x1xf32>
      %136 = math.rsqrt %135 : vector<16x1xf32>
      %137 = vector.broadcast %136 : vector<16x1xf32> to vector<16x128xf32>
      %138 = arith.mulf %133, %137 : vector<16x128xf32>
      %139 = vector.broadcast %0 : vector<1x128xf32> to vector<16x128xf32>
      %140 = arith.mulf %138, %139 : vector<16x128xf32>
      %141 = vector.broadcast %1 : vector<1x128xf32> to vector<16x128xf32>
      %142 = arith.addf %140, %141 : vector<16x128xf32>
      %c0_53 = arith.constant 0 : index
      %c0_54 = arith.constant 0 : index
      %143 = vector.load %arg8[%c0_53, %c0_54] : memref<128x260xf32, #tpu.memory_space<vmem>>, vector<128x260xf32>
      %cst_55 = arith.constant dense<0.000000e+00> : vector<16x260xf32>
      %144 = tpu.matmul %142, %143, %cst_55 {dimension_numbers = #tpu.dot_dimension_numbers<[1], [0], [0], [1], [0, 0, 1, 1], [], []>} : vector<16x128xf32>, vector<128x260xf32>, vector<16x260xf32> -> vector<16x260xf32>
      %145 = vector.extract_strided_slice %144 {offsets = [0, 0], sizes = [16, 128], strides = [1, 1]} : vector<16x260xf32> to vector<16x128xf32>
      %c0_56 = arith.constant 0 : index
      %c0_57 = arith.constant 0 : index
      %146 = vector.load %arg12[%c0_56, %c0_57] : memref<16x128xf32, #tpu.memory_space<vmem>>, vector<16x128xf32>
      tpu.vector_store %arg12[%c0_56, %c0_57], %145 {strides = array<i32>} : memref<16x128xf32, #tpu.memory_space<vmem>>, vector<16x128xf32>,
      %147 = vector.extract_strided_slice %144 {offsets = [0, 128], sizes = [16, 132], strides = [1, 1]} : vector<16x260xf32> to vector<16x132xf32>
      %c0_58 = arith.constant 0 : index
      %c0_59 = arith.constant 0 : index
      %148 = vector.load %arg11[%c0_58, %c0_59] : memref<16x132xf32, #tpu.memory_space<vmem>>, vector<16x132xf32>
      tpu.vector_store %arg11[%c0_58, %c0_59], %147 {strides = array<i32>} : memref<16x132xf32, #tpu.memory_space<vmem>>, vector<16x132xf32>,
    } else {
    }
    %c0_4 = arith.constant 0 : index
    %c0_5 = arith.constant 0 : index
    %c0_6 = arith.constant 0 : index
    %c0_7 = arith.constant 0 : index
    %5 = vector.load %arg3[%c0_4, %c0_5, %c0_6, %c0_7] : memref<1x1x16x128xf32, #tpu.memory_space<vmem>>, vector<1x1x16x128xf32>
    %6 = vector.shape_cast %5 : vector<1x1x16x128xf32> to vector<16x128xf32>
    %cst = arith.constant dense<0.000000e+00> : vector<16xf32>
    %7 = vector.multi_reduction <add>, %6, %cst [1] : vector<16x128xf32> to vector<16xf32>
    %8 = vector.shape_cast %7 : vector<16xf32> to vector<16x1xf32>
    %cst_8 = arith.constant 1.280000e+02 : f32
    %9 = vector.broadcast %cst_8 : f32 to vector<16x1xf32>
    %10 = arith.divf %8, %9 : vector<16x1xf32>
    %11 = vector.broadcast %10 : vector<16x1xf32> to vector<16x128xf32>
    %12 = arith.subf %6, %11 : vector<16x128xf32>
    %13 = arith.mulf %12, %12 : vector<16x128xf32>
    %cst_9 = arith.constant dense<0.000000e+00> : vector<16xf32>
    %14 = vector.multi_reduction <add>, %13, %cst_9 [1] : vector<16x128xf32> to vector<16xf32>
    %15 = vector.shape_cast %14 : vector<16xf32> to vector<16x1xf32>
    %cst_10 = arith.constant 1.280000e+02 : f32
    %16 = vector.broadcast %cst_10 : f32 to vector<16x1xf32>
    %17 = arith.divf %15, %16 : vector<16x1xf32>
    %18 = vector.broadcast %10 : vector<16x1xf32> to vector<16x128xf32>
    %19 = arith.subf %6, %18 : vector<16x128xf32>
    %cst_11 = arith.constant 9.99999974E-6 : f32
    %20 = vector.broadcast %cst_11 : f32 to vector<16x1xf32>
    %21 = arith.addf %17, %20 : vector<16x1xf32>
    %22 = math.rsqrt %21 : vector<16x1xf32>
    %23 = vector.broadcast %22 : vector<16x1xf32> to vector<16x128xf32>
    %24 = arith.mulf %19, %23 : vector<16x128xf32>
    %25 = vector.broadcast %0 : vector<1x128xf32> to vector<16x128xf32>
    %26 = arith.mulf %24, %25 : vector<16x128xf32>
    %27 = vector.broadcast %1 : vector<1x128xf32> to vector<16x128xf32>
    %28 = arith.addf %26, %27 : vector<16x128xf32>
    %c0_12 = arith.constant 0 : index
    %c0_13 = arith.constant 0 : index
    %29 = vector.load %arg7[%c0_12, %c0_13] : memref<128x256xf32, #tpu.memory_space<vmem>>, vector<128x256xf32>
    %cst_14 = arith.constant dense<0.000000e+00> : vector<16x256xf32>
    %30 = tpu.matmul %28, %29, %cst_14 {dimension_numbers = #tpu.dot_dimension_numbers<[1], [0], [0], [1], [0, 0, 1, 1], [], []>} : vector<16x128xf32>, vector<128x256xf32>, vector<16x256xf32> -> vector<16x256xf32>
    %31 = vector.extract_strided_slice %30 {offsets = [0, 0], sizes = [16, 128], strides = [1, 1]} : vector<16x256xf32> to vector<16x128xf32>
    %32 = vector.extract_strided_slice %30 {offsets = [0, 128], sizes = [16, 128], strides = [1, 1]} : vector<16x256xf32> to vector<16x128xf32>
    %33 = arith.negf %32 : vector<16x128xf32>
    %34 = math.exp %33 : vector<16x128xf32>
    %cst_15 = arith.constant 1.000000e+00 : f32
    %35 = vector.broadcast %cst_15 : f32 to vector<16x128xf32>
    %36 = arith.addf %35, %34 : vector<16x128xf32>
    %37 = arith.divf %35, %36 : vector<16x128xf32>
    %c0_16 = arith.constant 0 : index
    %c0_17 = arith.constant 0 : index
    %38 = vector.load %arg11[%c0_16, %c0_17] : memref<16x132xf32, #tpu.memory_space<vmem>>, vector<16x132xf32>
    %c0_18 = arith.constant 0 : index
    %c0_19 = arith.constant 0 : index
    %39 = vector.load %arg12[%c0_18, %c0_19] : memref<16x128xf32, #tpu.memory_space<vmem>>, vector<16x128xf32>
    %cst_20 = arith.constant 1.000000e+00 : f32
    %40 = vector.broadcast %cst_20 : f32 to vector<16x1xf32>
    %41 = vector.extract_strided_slice %31 {offsets = [0, 0], sizes = [16, 32], strides = [1, 1]} : vector<16x128xf32> to vector<16x32xf32>
    %42 = tpu.concatenate %41, %40 in 1 : vector<16x32xf32>, vector<16x1xf32> -> vector<16x33xf32>
    %43 = vector.extract_strided_slice %38 {offsets = [0, 0], sizes = [16, 33], strides = [1, 1]} : vector<16x132xf32> to vector<16x33xf32>
    %cst_21 = arith.constant dense<0.000000e+00> : vector<16x16xf32>
    %44 = tpu.matmul %42, %43, %cst_21 {dimension_numbers = #tpu.dot_dimension_numbers<[1], [1], [0], [0], [0, 0, 1, 0], [], []>} : vector<16x33xf32>, vector<16x33xf32>, vector<16x16xf32> -> vector<16x16xf32>
    %cst_22 = arith.constant dense<0xFF800000> : vector<16xf32>
    %45 = vector.multi_reduction <maximumf>, %44, %cst_22 [1] : vector<16x16xf32> to vector<16xf32>
    %46 = vector.shape_cast %45 : vector<16xf32> to vector<16x1xf32>
    %47 = vector.broadcast %46 : vector<16x1xf32> to vector<16x16xf32>
    %48 = arith.subf %44, %47 : vector<16x16xf32>
    %49 = math.exp %48 : vector<16x16xf32>
    %cst_23 = arith.constant dense<0.000000e+00> : vector<16xf32>
    %50 = vector.multi_reduction <add>, %49, %cst_23 [1] : vector<16x16xf32> to vector<16xf32>
    %51 = vector.shape_cast %50 : vector<16xf32> to vector<16x1xf32>
    %52 = tpu.reciprocal %51 {approx = true} : vector<16x1xf32> -> vector<16x1xf32>
    %53 = vector.broadcast %52 : vector<16x1xf32> to vector<16x16xf32>
    %54 = arith.mulf %49, %53 : vector<16x16xf32>
    %55 = vector.extract_strided_slice %39 {offsets = [0, 0], sizes = [16, 32], strides = [1, 1]} : vector<16x128xf32> to vector<16x32xf32>
    %cst_24 = arith.constant dense<0.000000e+00> : vector<16x32xf32>
    %56 = tpu.matmul %54, %55, %cst_24 {dimension_numbers = #tpu.dot_dimension_numbers<[1], [0], [0], [1], [0, 0, 1, 1], [], []>} : vector<16x16xf32>, vector<16x32xf32>, vector<16x32xf32> -> vector<16x32xf32>
    %57 = vector.extract_strided_slice %37 {offsets = [0, 0], sizes = [16, 32], strides = [1, 1]} : vector<16x128xf32> to vector<16x32xf32>
    %58 = arith.mulf %57, %56 : vector<16x32xf32>
    %59 = vector.extract_strided_slice %31 {offsets = [0, 32], sizes = [16, 32], strides = [1, 1]} : vector<16x128xf32> to vector<16x32xf32>
    %60 = tpu.concatenate %59, %40 in 1 : vector<16x32xf32>, vector<16x1xf32> -> vector<16x33xf32>
    %61 = vector.extract_strided_slice %38 {offsets = [0, 33], sizes = [16, 33], strides = [1, 1]} : vector<16x132xf32> to vector<16x33xf32>
    %cst_25 = arith.constant dense<0.000000e+00> : vector<16x16xf32>
    %62 = tpu.matmul %60, %61, %cst_25 {dimension_numbers = #tpu.dot_dimension_numbers<[1], [1], [0], [0], [0, 0, 1, 0], [], []>} : vector<16x33xf32>, vector<16x33xf32>, vector<16x16xf32> -> vector<16x16xf32>
    %cst_26 = arith.constant dense<0xFF800000> : vector<16xf32>
    %63 = vector.multi_reduction <maximumf>, %62, %cst_26 [1] : vector<16x16xf32> to vector<16xf32>
    %64 = vector.shape_cast %63 : vector<16xf32> to vector<16x1xf32>
    %65 = vector.broadcast %64 : vector<16x1xf32> to vector<16x16xf32>
    %66 = arith.subf %62, %65 : vector<16x16xf32>
    %67 = math.exp %66 : vector<16x16xf32>
    %cst_27 = arith.constant dense<0.000000e+00> : vector<16xf32>
    %68 = vector.multi_reduction <add>, %67, %cst_27 [1] : vector<16x16xf32> to vector<16xf32>
    %69 = vector.shape_cast %68 : vector<16xf32> to vector<16x1xf32>
    %70 = tpu.reciprocal %69 {approx = true} : vector<16x1xf32> -> vector<16x1xf32>
    %71 = vector.broadcast %70 : vector<16x1xf32> to vector<16x16xf32>
    %72 = arith.mulf %67, %71 : vector<16x16xf32>
    %73 = vector.extract_strided_slice %39 {offsets = [0, 32], sizes = [16, 32], strides = [1, 1]} : vector<16x128xf32> to vector<16x32xf32>
    %cst_28 = arith.constant dense<0.000000e+00> : vector<16x32xf32>
    %74 = tpu.matmul %72, %73, %cst_28 {dimension_numbers = #tpu.dot_dimension_numbers<[1], [0], [0], [1], [0, 0, 1, 1], [], []>} : vector<16x16xf32>, vector<16x32xf32>, vector<16x32xf32> -> vector<16x32xf32>
    %75 = vector.extract_strided_slice %37 {offsets = [0, 32], sizes = [16, 32], strides = [1, 1]} : vector<16x128xf32> to vector<16x32xf32>
    %76 = arith.mulf %75, %74 : vector<16x32xf32>
    %77 = vector.extract_strided_slice %31 {offsets = [0, 64], sizes = [16, 32], strides = [1, 1]} : vector<16x128xf32> to vector<16x32xf32>
    %78 = tpu.concatenate %77, %40 in 1 : vector<16x32xf32>, vector<16x1xf32> -> vector<16x33xf32>
    %79 = vector.extract_strided_slice %38 {offsets = [0, 66], sizes = [16, 33], strides = [1, 1]} : vector<16x132xf32> to vector<16x33xf32>
    %cst_29 = arith.constant dense<0.000000e+00> : vector<16x16xf32>
    %80 = tpu.matmul %78, %79, %cst_29 {dimension_numbers = #tpu.dot_dimension_numbers<[1], [1], [0], [0], [0, 0, 1, 0], [], []>} : vector<16x33xf32>, vector<16x33xf32>, vector<16x16xf32> -> vector<16x16xf32>
    %cst_30 = arith.constant dense<0xFF800000> : vector<16xf32>
    %81 = vector.multi_reduction <maximumf>, %80, %cst_30 [1] : vector<16x16xf32> to vector<16xf32>
    %82 = vector.shape_cast %81 : vector<16xf32> to vector<16x1xf32>
    %83 = vector.broadcast %82 : vector<16x1xf32> to vector<16x16xf32>
    %84 = arith.subf %80, %83 : vector<16x16xf32>
    %85 = math.exp %84 : vector<16x16xf32>
    %cst_31 = arith.constant dense<0.000000e+00> : vector<16xf32>
    %86 = vector.multi_reduction <add>, %85, %cst_31 [1] : vector<16x16xf32> to vector<16xf32>
    %87 = vector.shape_cast %86 : vector<16xf32> to vector<16x1xf32>
    %88 = tpu.reciprocal %87 {approx = true} : vector<16x1xf32> -> vector<16x1xf32>
    %89 = vector.broadcast %88 : vector<16x1xf32> to vector<16x16xf32>
    %90 = arith.mulf %85, %89 : vector<16x16xf32>
    %91 = vector.extract_strided_slice %39 {offsets = [0, 64], sizes = [16, 32], strides = [1, 1]} : vector<16x128xf32> to vector<16x32xf32>
    %cst_32 = arith.constant dense<0.000000e+00> : vector<16x32xf32>
    %92 = tpu.matmul %90, %91, %cst_32 {dimension_numbers = #tpu.dot_dimension_numbers<[1], [0], [0], [1], [0, 0, 1, 1], [], []>} : vector<16x16xf32>, vector<16x32xf32>, vector<16x32xf32> -> vector<16x32xf32>
    %93 = vector.extract_strided_slice %37 {offsets = [0, 64], sizes = [16, 32], strides = [1, 1]} : vector<16x128xf32> to vector<16x32xf32>
    %94 = arith.mulf %93, %92 : vector<16x32xf32>
    %95 = vector.extract_strided_slice %31 {offsets = [0, 96], sizes = [16, 32], strides = [1, 1]} : vector<16x128xf32> to vector<16x32xf32>
    %96 = tpu.concatenate %95, %40 in 1 : vector<16x32xf32>, vector<16x1xf32> -> vector<16x33xf32>
    %97 = vector.extract_strided_slice %38 {offsets = [0, 99], sizes = [16, 33], strides = [1, 1]} : vector<16x132xf32> to vector<16x33xf32>
    %cst_33 = arith.constant dense<0.000000e+00> : vector<16x16xf32>
    %98 = tpu.matmul %96, %97, %cst_33 {dimension_numbers = #tpu.dot_dimension_numbers<[1], [1], [0], [0], [0, 0, 1, 0], [], []>} : vector<16x33xf32>, vector<16x33xf32>, vector<16x16xf32> -> vector<16x16xf32>
    %cst_34 = arith.constant dense<0xFF800000> : vector<16xf32>
    %99 = vector.multi_reduction <maximumf>, %98, %cst_34 [1] : vector<16x16xf32> to vector<16xf32>
    %100 = vector.shape_cast %99 : vector<16xf32> to vector<16x1xf32>
    %101 = vector.broadcast %100 : vector<16x1xf32> to vector<16x16xf32>
    %102 = arith.subf %98, %101 : vector<16x16xf32>
    %103 = math.exp %102 : vector<16x16xf32>
    %cst_35 = arith.constant dense<0.000000e+00> : vector<16xf32>
    %104 = vector.multi_reduction <add>, %103, %cst_35 [1] : vector<16x16xf32> to vector<16xf32>
    %105 = vector.shape_cast %104 : vector<16xf32> to vector<16x1xf32>
    %106 = tpu.reciprocal %105 {approx = true} : vector<16x1xf32> -> vector<16x1xf32>
    %107 = vector.broadcast %106 : vector<16x1xf32> to vector<16x16xf32>
    %108 = arith.mulf %103, %107 : vector<16x16xf32>
    %109 = vector.extract_strided_slice %39 {offsets = [0, 96], sizes = [16, 32], strides = [1, 1]} : vector<16x128xf32> to vector<16x32xf32>
    %cst_36 = arith.constant dense<0.000000e+00> : vector<16x32xf32>
    %110 = tpu.matmul %108, %109, %cst_36 {dimension_numbers = #tpu.dot_dimension_numbers<[1], [0], [0], [1], [0, 0, 1, 1], [], []>} : vector<16x16xf32>, vector<16x32xf32>, vector<16x32xf32> -> vector<16x32xf32>
    %111 = vector.extract_strided_slice %37 {offsets = [0, 96], sizes = [16, 32], strides = [1, 1]} : vector<16x128xf32> to vector<16x32xf32>
    %112 = arith.mulf %111, %110 : vector<16x32xf32>
    %113 = tpu.concatenate %58, %76, %94, %112 in 1 : vector<16x32xf32>, vector<16x32xf32>, vector<16x32xf32>, vector<16x32xf32> -> vector<16x128xf32>
    %c0_37 = arith.constant 0 : index
    %c0_38 = arith.constant 0 : index
    %114 = vector.load %arg9[%c0_37, %c0_38] : memref<128x128xf32, #tpu.memory_space<vmem>>, vector<128x128xf32>
    %cst_39 = arith.constant dense<0.000000e+00> : vector<16x128xf32>
    %115 = tpu.matmul %113, %114, %cst_39 {dimension_numbers = #tpu.dot_dimension_numbers<[1], [0], [0], [1], [0, 0, 1, 1], [], []>} : vector<16x128xf32>, vector<128x128xf32>, vector<16x128xf32> -> vector<16x128xf32>
    %c0_40 = arith.constant 0 : index
    %c0_41 = arith.constant 0 : index
    %c0_42 = arith.constant 0 : index
    %c0_43 = arith.constant 0 : index
    %116 = vector.load %arg10[%c0_40, %c0_41, %c0_42, %c0_43] : memref<1x1x16x128xf32, #tpu.memory_space<vmem>>, vector<1x1x16x128xf32>
    %117 = vector.shape_cast %116 : vector<1x1x16x128xf32> to vector<16x128xf32>
    %118 = vector.shape_cast %115 : vector<16x128xf32> to vector<1x1x16x128xf32>
    tpu.vector_store %arg10[%c0_40, %c0_41, %c0_42, %c0_43], %118 {strides = array<i32>} : memref<1x1x16x128xf32, #tpu.memory_space<vmem>>, vector<1x1x16x128xf32>,
    return
  }
  func.func @transform_0(%arg0: i32, %arg1: i32, %arg2: i32) -> (i32, i32, i32, i32) {
    %c0_i32 = arith.constant 0 : i32
    %c0_i32_0 = arith.constant 0 : i32
    return %arg0, %arg1, %arg2, %c0_i32 : i32, i32, i32, i32
  }
  func.func @transform_1(%arg0: i32, %arg1: i32, %arg2: i32) -> (i32, i32, i32, i32) {
    %c0_i32 = arith.constant 0 : i32
    %c0_i32_0 = arith.constant 0 : i32
    %c0_i32_1 = arith.constant 0 : i32
    return %arg0, %arg1, %c0_i32, %c0_i32_0 : i32, i32, i32, i32
  }
  func.func @transform_2(%arg0: i32, %arg1: i32, %arg2: i32) -> (i32, i32) {
    %c0_i32 = arith.constant 0 : i32
    %c0_i32_0 = arith.constant 0 : i32
    %c0_i32_1 = arith.constant 0 : i32
    return %c0_i32, %c0_i32_0 : i32, i32
  }
  func.func @transform_3(%arg0: i32, %arg1: i32, %arg2: i32) -> (i32, i32) {
    %c0_i32 = arith.constant 0 : i32
    %c0_i32_0 = arith.constant 0 : i32
    %c0_i32_1 = arith.constant 0 : i32
    return %c0_i32, %c0_i32_0 : i32, i32
  }
  func.func @transform_4(%arg0: i32, %arg1: i32, %arg2: i32) -> (i32, i32) {
    %c0_i32 = arith.constant 0 : i32
    %c0_i32_0 = arith.constant 0 : i32
    %c0_i32_1 = arith.constant 0 : i32
    return %c0_i32, %c0_i32_0 : i32, i32
  }
  func.func @transform_5(%arg0: i32, %arg1: i32, %arg2: i32) -> (i32, i32) {
    %c0_i32 = arith.constant 0 : i32
    %c0_i32_0 = arith.constant 0 : i32
    %c0_i32_1 = arith.constant 0 : i32
    return %c0_i32, %c0_i32_0 : i32, i32
  }
  func.func @transform_6(%arg0: i32, %arg1: i32, %arg2: i32) -> (i32, i32) {
    %c0_i32 = arith.constant 0 : i32
    %c0_i32_0 = arith.constant 0 : i32
    %c0_i32_1 = arith.constant 0 : i32
    return %c0_i32, %c0_i32_0 : i32, i32
  }
  func.func @transform_7(%arg0: i32, %arg1: i32, %arg2: i32) -> (i32, i32, i32, i32) {
    %c0_i32 = arith.constant 0 : i32
    %c0_i32_0 = arith.constant 0 : i32
    return %arg0, %arg1, %arg2, %c0_i32 : i32, i32, i32, i32
  }
}

</mosaic_0001>

<llo_original>
// kernel: triangle_attention_ending_node.1
$region0: #{triangle_attention_ending_node.1}
  #allocation0 [shape = 'u32[]', space=smem, size = 0x4, offset = 0x4, fixed_abs, tag = 'smem constant byte address 0x4 - core index']
  #allocation1 [shape = 'u32[72,128]{1,0:T(1,128)}', space=vmem, size = 0x9000, scoped, tag = 'internal scratch']
  #allocation2 [shape = 'f32[16,132]{1,0:T(8,128)}', space=vmem, size = 0x4000, scoped, tag = 'scratch operand']
  #allocation3 [shape = 'f32[16,128]{1,0:T(8,128)}', space=vmem, size = 0x2000, scoped, tag = 'scratch operand']
  %s0 = inlined_call_operand.vmem [shape: f32[2,16,16,128], index: 0, kind: input, shape index: {}]
  %s1 = inlined_call_operand.vmem [shape: f32[2,16,16,128], index: 1, kind: input, shape index: {}]
  %s2 = inlined_call_operand.vmem [shape: f32[1,128], index: 2, kind: input, shape index: {}]
  %s3 = inlined_call_operand.vmem [shape: f32[1,128], index: 3, kind: input, shape index: {}]
  %s4 = inlined_call_operand.vmem [shape: f32[128,256], index: 4, kind: input, shape index: {}]
  %s5 = inlined_call_operand.vmem [shape: f32[128,260], index: 5, kind: input, shape index: {}]
  %s6 = inlined_call_operand.vmem [shape: f32[128,128], index: 6, kind: input, shape index: {}]
  %s7 = inlined_call_operand.hbm [shape: f32[2,16,16,128], index: 7, kind: output, shape index: {}]
  %s8 = sld [smem:[#allocation0]]
  $region65: #{triangle_attention_ending_node.1} parent=0
    _
  %s10 = ssub.s32 1, %s8
  %s11 = scalar_select 0, %s10, %s8
  $region1: #{triangle_attention_ending_node.1} parent=0
    #allocation4 [shape = 'u8[16384]{0}', space=vmem, size = 0x4000, scoped, tag = 'output window, operand 0']
    #allocation5 [shape = 's32[2]{0}', space=sflag, size = 0x8, scoped, tag = 'scoped memory for triangle_attention_ending_node.1']
    %12 = vsyncpa [#allocation5], 0
    %s13 = scalar_lea.sflag [#allocation5], 1
    %14 = vsyncpa %s13, 0
    loop: start=0, step=1, limit=34
    $region2: #{triangle_attention_ending_node.1} parent=1 // loop_pre_header
      _
    $region3: #{triangle_attention_ending_node.1} parent=1 // loop_header
      %s16 = sphi 0, %s20
      %p17 = scmp.ge.s32.totalorder %s16, 34
      %s23 = sphi 0, %s42
      %s24 = sphi 0, %s38
      %s25 = sphi 0, %s34
      %s26 = sphi 0, %s23
      %s27 = sphi 0, %s24
      %s28 = sphi 0, %s25
      %s29 = sphi 0, %s26
      %s30 = sphi 0, %s27
      %s31 = sphi 0, %s28
      %s49 = sphi 0, %s51
      %s52 = sphi 0, %s49
      %s53 = sphi 0, %s52
      %s69 = sphi 0, %s53
      %s77 = sphi 0, %s79
      %s80 = sphi 0, %s77
      %s81 = sphi 0, %s80
      %s97 = sphi 0, %s81
      %s101 = sphi 0, %s101
      %s103 = sphi 0, %s101
      %s104 = sphi 0, %s103
      %s118 = sphi 0, %s104
      %s122 = sphi 0, %s122
      %s124 = sphi 0, %s122
      %s125 = sphi 0, %s124
      %s139 = sphi 0, %s125
      %s143 = sphi 0, %s143
      %s145 = sphi 0, %s143
      %s146 = sphi 0, %s145
      %s160 = sphi 0, %s146
      %s164 = sphi 0, %s164
      %s166 = sphi 0, %s164
      %s167 = sphi 0, %s166
      %s181 = sphi 0, %s167
      %s185 = sphi 0, %s185
      %s187 = sphi 0, %s185
      %s188 = sphi 0, %s187
      %s202 = sphi 0, %s188
      %s212 = sphi 0, %s214
      %s215 = sphi 0, %s212
      %s216 = sphi 0, %s215
      %s232 = sphi 0, %s216
    $region4: #{triangle_attention_ending_node.1} parent=1 // loop_header_branch
      %19 = sbr.rel (%p17) target = $region8
    $region5: #{triangle_attention_ending_node.1} parent=1 // loop_body
      %s21 = ssub.s32 %s16, 1
      %s22 = ssub.s32 %s16, 2
      %s32 = sadd.s32 1, %s25
      %p33 = scmp.ge.s32.totalorder %s32, 1
      %s34 = scalar_select %p33, 0, %s32
      %s35 = sadd.s32 1, %s24
      %s36 = scalar_select %p33, %s35, %s24
      %p37 = scmp.ge.s32.totalorder %s36, 16
      %s38 = scalar_select %p37, 0, %s36
      %s39 = sadd.s32 1, %s23
      %s40 = scalar_select %p37, %s39, %s23
      %p41 = scmp.ge.s32.totalorder %s40, 2
      %s42 = scalar_select %p41, 0, %s40
      %s43 = ssub.s32 %s23, %s42
      %s44 = ssub.s32 %s24, %s38
      %s45 = sor.u32 %s43, %s44
      %s46 = ssub.s32 %s25, %s34
      %s47 = sor.u32 %s45, %s46
      %p48 = scmp.eq.s32.totalorder %s47, 0
      %s50 = sadd.s32 %s49, 1
      %s51 = scalar_select %p48, %s49, %s50
      %p54 = pneg %p48
      %p55 = scmp.eq.s32.totalorder %s16, 31
      %p56 = por %p54, %p55
      %p57 = scmp.ne.s32.totalorder %s49, %s52
      %p58 = scmp.eq.s32.totalorder %s16, 0
      %p59 = por %p57, %p58
      %p60 = scmp.ne.s32.totalorder %s49, %s52
      %p61 = scmp.eq.s32.totalorder %s21, 31
      %p62 = por %p60, %p61
      %p63 = scmp.ne.s32.totalorder %s52, %s53
      %p64 = scmp.eq.s32.totalorder %s21, 0
      %p65 = por %p63, %p64
      %p66 = scmp.ne.s32.totalorder %s52, %s53
      %p67 = scmp.eq.s32.totalorder %s22, 31
      %p68 = por %p66, %p67
      %p70 = scmp.ne.s32.totalorder %s53, %s69
      %p71 = scmp.eq.s32.totalorder %s22, 0
      %p72 = por %p70, %p71
      %s73 = ssub.s32 %s23, %s42
      %s74 = ssub.s32 %s24, %s38
      %s75 = sor.u32 %s73, %s74
      %p76 = scmp.eq.s32.totalorder %s75, 0
      %s78 = sadd.s32 %s77, 1
      %s79 = scalar_select %p76, %s77, %s78
      %p82 = pneg %p76
      %p83 = scmp.eq.s32.totalorder %s16, 31
      %p84 = por %p82, %p83
      %p85 = scmp.ne.s32.totalorder %s77, %s80
      %p86 = scmp.eq.s32.totalorder %s16, 0
      %p87 = por %p85, %p86
      %p88 = scmp.ne.s32.totalorder %s77, %s80
      %p89 = scmp.eq.s32.totalorder %s21, 31
      %p90 = por %p88, %p89
      %p91 = scmp.ne.s32.totalorder %s80, %s81
      %p92 = scmp.eq.s32.totalorder %s21, 0
      %p93 = por %p91, %p92
      %p94 = scmp.ne.s32.totalorder %s80, %s81
      %p95 = scmp.eq.s32.totalorder %s22, 31
      %p96 = por %p94, %p95
      %p98 = scmp.ne.s32.totalorder %s81, %s97
      %p99 = scmp.eq.s32.totalorder %s22, 0
      %p100 = por %p98, %p99
      %s102 = sadd.s32 %s101, 1
      %p105 = scmp.eq.s32.totalorder %s16, 31
      %p106 = scmp.ne.s32.totalorder %s101, %s103
      %p107 = scmp.eq.s32.totalorder %s16, 0
      %p108 = por %p106, %p107
      %p109 = scmp.ne.s32.totalorder %s101, %s103
      %p110 = scmp.eq.s32.totalorder %s21, 31
      %p111 = por %p109, %p110
      %p112 = scmp.ne.s32.totalorder %s103, %s104
      %p113 = scmp.eq.s32.totalorder %s21, 0
      %p114 = por %p112, %p113
      %p115 = scmp.ne.s32.totalorder %s103, %s104
      %p116 = scmp.eq.s32.totalorder %s22, 31
      %p117 = por %p115, %p116
      %p119 = scmp.ne.s32.totalorder %s104, %s118
      %p120 = scmp.eq.s32.totalorder %s22, 0
      %p121 = por %p119, %p120
      %s123 = sadd.s32 %s122, 1
      %p126 = scmp.eq.s32.totalorder %s16, 31
      %p127 = scmp.ne.s32.totalorder %s122, %s124
      %p128 = scmp.eq.s32.totalorder %s16, 0
      %p129 = por %p127, %p128
      %p130 = scmp.ne.s32.totalorder %s122, %s124
      %p131 = scmp.eq.s32.totalorder %s21, 31
      %p132 = por %p130, %p131
      %p133 = scmp.ne.s32.totalorder %s124, %s125
      %p134 = scmp.eq.s32.totalorder %s21, 0
      %p135 = por %p133, %p134
      %p136 = scmp.ne.s32.totalorder %s124, %s125
      %p137 = scmp.eq.s32.totalorder %s22, 31
      %p138 = por %p136, %p137
      %p140 = scmp.ne.s32.totalorder %s125, %s139
      %p141 = scmp.eq.s32.totalorder %s22, 0
      %p142 = por %p140, %p141
      %s144 = sadd.s32 %s143, 1
      %p147 = scmp.eq.s32.totalorder %s16, 31
      %p148 = scmp.ne.s32.totalorder %s143, %s145
      %p149 = scmp.eq.s32.totalorder %s16, 0
      %p150 = por %p148, %p149
      %p151 = scmp.ne.s32.totalorder %s143, %s145
      %p152 = scmp.eq.s32.totalorder %s21, 31
      %p153 = por %p151, %p152
      %p154 = scmp.ne.s32.totalorder %s145, %s146
      %p155 = scmp.eq.s32.totalorder %s21, 0
      %p156 = por %p154, %p155
      %p157 = scmp.ne.s32.totalorder %s145, %s146
      %p158 = scmp.eq.s32.totalorder %s22, 31
      %p159 = por %p157, %p158
      %p161 = scmp.ne.s32.totalorder %s146, %s160
      %p162 = scmp.eq.s32.totalorder %s22, 0
      %p163 = por %p161, %p162
      %s165 = sadd.s32 %s164, 1
      %p168 = scmp.eq.s32.totalorder %s16, 31
      %p169 = scmp.ne.s32.totalorder %s164, %s166
      %p170 = scmp.eq.s32.totalorder %s16, 0
      %p171 = por %p169, %p170
      %p172 = scmp.ne.s32.totalorder %s164, %s166
      %p173 = scmp.eq.s32.totalorder %s21, 31
      %p174 = por %p172, %p173
      %p175 = scmp.ne.s32.totalorder %s166, %s167
      %p176 = scmp.eq.s32.totalorder %s21, 0
      %p177 = por %p175, %p176
      %p178 = scmp.ne.s32.totalorder %s166, %s167
      %p179 = scmp.eq.s32.totalorder %s22, 31
      %p180 = por %p178, %p179
      %p182 = scmp.ne.s32.totalorder %s167, %s181
      %p183 = scmp.eq.s32.totalorder %s22, 0
      %p184 = por %p182, %p183
      %s186 = sadd.s32 %s185, 1
      %p189 = scmp.eq.s32.totalorder %s16, 31
      %p190 = scmp.ne.s32.totalorder %s185, %s187
      %p191 = scmp.eq.s32.totalorder %s16, 0
      %p192 = por %p190, %p191
      %p193 = scmp.ne.s32.totalorder %s185, %s187
      %p194 = scmp.eq.s32.totalorder %s21, 31
      %p195 = por %p193, %p194
      %p196 = scmp.ne.s32.totalorder %s187, %s188
      %p197 = scmp.eq.s32.totalorder %s21, 0
      %p198 = por %p196, %p197
      %p199 = scmp.ne.s32.totalorder %s187, %s188
      %p200 = scmp.eq.s32.totalorder %s22, 31
      %p201 = por %p199, %p200
      %p203 = scmp.ne.s32.totalorder %s188, %s202
      %p204 = scmp.eq.s32.totalorder %s22, 0
      %p205 = por %p203, %p204
      %s206 = ssub.s32 %s23, %s42
      %s207 = ssub.s32 %s24, %s38
      %s208 = sor.u32 %s206, %s207
      %s209 = ssub.s32 %s25, %s34
      %s210 = sor.u32 %s208, %s209
      %p211 = scmp.eq.s32.totalorder %s210, 0
      %s213 = sadd.s32 %s212, 1
      %s214 = scalar_select %p211, %s212, %s213
      %p217 = pneg %p211
      %p218 = scmp.eq.s32.totalorder %s16, 31
      %p219 = por %p217, %p218
      %p220 = scmp.ne.s32.totalorder %s212, %s215
      %p221 = scmp.eq.s32.totalorder %s16, 0
      %p222 = por %p220, %p221
      %p223 = scmp.ne.s32.totalorder %s212, %s215
      %p224 = scmp.eq.s32.totalorder %s21, 31
      %p225 = por %p223, %p224
      %p226 = scmp.ne.s32.totalorder %s215, %s216
      %p227 = scmp.eq.s32.totalorder %s21, 0
      %p228 = por %p226, %p227
      %p229 = scmp.ne.s32.totalorder %s215, %s216
      %p230 = scmp.eq.s32.totalorder %s22, 31
      %p231 = por %p229, %p230
      %p233 = scmp.ne.s32.totalorder %s216, %s232
      %p234 = scmp.eq.s32.totalorder %s22, 0
      %p235 = por %p233, %p234
      %p236 = scmp.le.s32.totalorder 1, %s16
      %p237 = scmp.lt.s32.totalorder %s16, 33
      %p238 = pnand %p236, %p237
      %p239 = pneg %p238
      // Predicated region
      $region9: #{triangle_attention_ending_node.1} parent=5 // pred_check
        _
      $region10: #{triangle_attention_ending_node.1} parent=5 // pred_check_branch
        %241 = sbr.rel (%p238) target = $region12
      $region11: #{triangle_attention_ending_node.1} parent=5 // pred_region
        %s242 = ssub.s32 %s16, 1
        // Predicated region
        $region13: #{triangle_attention_ending_node.1} parent=11 // pred_check
          %p243 = pneg %p114
        $region14: #{triangle_attention_ending_node.1} parent=11 // pred_check_branch
          %245 = sbr.rel (%p243) target = $region16
        $region15: #{triangle_attention_ending_node.1} parent=11 // pred_region
          _
        $region16: #{triangle_attention_ending_node.1} parent=11 // pred_fallthru
          _
        // Predicated region
        $region17: #{triangle_attention_ending_node.1} parent=11 // pred_check
          %p246 = pneg %p135
        $region18: #{triangle_attention_ending_node.1} parent=11 // pred_check_branch
          %248 = sbr.rel (%p246) target = $region20
        $region19: #{triangle_attention_ending_node.1} parent=11 // pred_region
          _
        $region20: #{triangle_attention_ending_node.1} parent=11 // pred_fallthru
          _
        // Predicated region
        $region21: #{triangle_attention_ending_node.1} parent=11 // pred_check
          %p249 = pneg %p156
        $region22: #{triangle_attention_ending_node.1} parent=11 // pred_check_branch
          %251 = sbr.rel (%p249) target = $region24
        $region23: #{triangle_attention_ending_node.1} parent=11 // pred_region
          _
        $region24: #{triangle_attention_ending_node.1} parent=11 // pred_fallthru
          _
        // Predicated region
        $region25: #{triangle_attention_ending_node.1} parent=11 // pred_check
          %p252 = pneg %p177
        $region26: #{triangle_attention_ending_node.1} parent=11 // pred_check_branch
          %254 = sbr.rel (%p252) target = $region28
        $region27: #{triangle_attention_ending_node.1} parent=11 // pred_region
          _
        $region28: #{triangle_attention_ending_node.1} parent=11 // pred_fallthru
          _
        // Predicated region
        $region29: #{triangle_attention_ending_node.1} parent=11 // pred_check
          %p255 = pneg %p198
        $region30: #{triangle_attention_ending_node.1} parent=11 // pred_check_branch
          %257 = sbr.rel (%p255) target = $region32
        $region31: #{triangle_attention_ending_node.1} parent=11 // pred_region
          _
        $region32: #{triangle_attention_ending_node.1} parent=11 // pred_fallthru
          _
      $region12: #{triangle_attention_ending_node.1} parent=5 // pred_fallthru
        _
      %p258 = scmp.lt.s32.totalorder %s16, 32
      // Predicated region
      $region33: #{triangle_attention_ending_node.1} parent=5 // pred_check
        %p259 = pneg %p258
      $region34: #{triangle_attention_ending_node.1} parent=5 // pred_check_branch
        %261 = sbr.rel (%p259) target = $region36
      $region35: #{triangle_attention_ending_node.1} parent=5 // pred_region
        // Predicated region
        $region37: #{triangle_attention_ending_node.1} parent=35 // pred_check
          %p262 = pneg %p59
        $region38: #{triangle_attention_ending_node.1} parent=35 // pred_check_branch
          %264 = sbr.rel (%p262) target = $region40
        $region39: #{triangle_attention_ending_node.1} parent=35 // pred_region
          %s265 = smul.u32 2, %s25
          %p266 = scmp.lt.s32.totalorder %s23, 1
          %s267 = scalar_select %p266, %s23, 1
          %p268 = scmp.lt.s32.totalorder %s24, 15
          %s269 = scalar_select %p268, %s24, 15
          %p270 = scmp.lt.s32.totalorder %s265, 1
          %s271 = scalar_select %p270, %s265, 1
          %s272 = smul.addr %s269, 2
          %s273 = sadd.s32 %s271, %s272
          %s274 = smul.addr %s267, 32
          %s275 = sadd.s32 %s273, %s274
          %s276 = smul.addr %s275, 8
          %s277 = scalar_lea.vmem %s0, %s276
          %s278 = smul.u32 2, %s25
        $region40: #{triangle_attention_ending_node.1} parent=35 // pred_fallthru
          _
        // Predicated region
        $region41: #{triangle_attention_ending_node.1} parent=35 // pred_check
          %p279 = pneg %p87
        $region42: #{triangle_attention_ending_node.1} parent=35 // pred_check_branch
          %281 = sbr.rel (%p279) target = $region44
        $region43: #{triangle_attention_ending_node.1} parent=35 // pred_region
          %p282 = scmp.lt.s32.totalorder %s23, 1
          %s283 = scalar_select %p282, %s23, 1
          %p284 = scmp.lt.s32.totalorder %s24, 15
          %s285 = scalar_select %p284, %s24, 15
          %s286 = smul.addr %s285, 2
          %s287 = smul.addr %s283, 32
          %s288 = sadd.s32 %s286, %s287
          %s289 = smul.addr %s288, 8
          %s290 = scalar_lea.vmem %s1, %s289
        $region44: #{triangle_attention_ending_node.1} parent=35 // pred_fallthru
          _
      $region36: #{triangle_attention_ending_node.1} parent=5 // pred_fallthru
        _
      %p291 = scmp.le.s32.totalorder 1, %s16
      %p292 = scmp.lt.s32.totalorder %s16, 33
      %p293 = pnand %p291, %p292
      %p294 = pneg %p293
      // Predicated region
      $region45: #{triangle_attention_ending_node.1} parent=5 // pred_check
        _
      $region46: #{triangle_attention_ending_node.1} parent=5 // pred_check_branch
        %296 = sbr.rel (%p293) target = $region48
      $region47: #{triangle_attention_ending_node.1} parent=5 // pred_region
        %s297 = ssub.s32 %s16, 1
        %s298 = smul.u32 2, %s28
        %p299 = scmp.lt.s32.totalorder %s26, 1
        %s300 = scalar_select %p299, %s26, 1
        %p301 = scmp.lt.s32.totalorder %s27, 15
        %s302 = scalar_select %p301, %s27, 15
        %p303 = scmp.lt.s32.totalorder %s298, 1
        %s304 = scalar_select %p303, %s298, 1
        %s305 = smul.addr %s302, 2
        %s306 = sadd.s32 %s304, %s305
        %s307 = smul.addr %s300, 32
        %s308 = sadd.s32 %s306, %s307
        %s309 = smul.addr %s308, 8
        %s310 = scalar_lea.vmem %s0, %s309
        %p311 = pneg %p65
        %p312 = pneg %p62
        %p313 = scmp.lt.s32.totalorder %s26, 1
        %s314 = scalar_select %p313, %s26, 1
        %p315 = scmp.lt.s32.totalorder %s27, 15
        %s316 = scalar_select %p315, %s27, 15
        %s317 = smul.addr %s316, 2
        %s318 = smul.addr %s314, 32
        %s319 = sadd.s32 %s317, %s318
        %s320 = smul.addr %s319, 8
        %s321 = scalar_lea.vmem %s1, %s320
        %p322 = pneg %p93
        %p323 = pneg %p90
        %p324 = pneg %p114
        %p325 = pneg %p111
        %p326 = pneg %p135
        %p327 = pneg %p132
        %p328 = pneg %p156
        %p329 = pneg %p153
        %p330 = pneg %p177
        %p331 = pneg %p174
        %p332 = pneg %p198
        %p333 = pneg %p195
        %p334 = pneg %p228
        %p335 = pneg %p225
        %s336 = sand.u32 %s215, 1
        %s337 = scalar_lea.sflag [#allocation5], %s336
        %s338 = sand.u32 %s215, 1
        %s339 = smul.addr %s338, 16
        %s340 = scalar_lea.vmem [#allocation4], %s339
        %s341 = smul.u32 2, %s28
        %p342 = scmp.lt.s32.totalorder %s26, 1
        %s343 = scalar_select %p342, %s26, 1
        %p344 = scmp.lt.s32.totalorder %s27, 15
        %s345 = scalar_select %p344, %s27, 15
        %p346 = scmp.lt.s32.totalorder %s341, 1
        %s347 = scalar_select %p346, %s341, 1
        %s348 = smul.addr %s345, 2
        %s349 = sadd.s32 %s347, %s348
        %s350 = smul.addr %s343, 32
        %s351 = sadd.s32 %s349, %s350
        %s352 = smul.addr %s351, 8
        %s353 = scalar_lea.vmem %s0, %s352
        %s354 = smul.u32 2, %s28
        %p355 = scmp.lt.s32.totalorder %s26, 1
        %s356 = scalar_select %p355, %s26, 1
        %p357 = scmp.lt.s32.totalorder %s27, 15
        %s358 = scalar_select %p357, %s27, 15
        %s359 = smul.addr %s358, 2
        %s360 = smul.addr %s356, 32
        %s361 = sadd.s32 %s359, %s360
        %s362 = smul.addr %s361, 8
        %s363 = scalar_lea.vmem %s1, %s362
        %s364 = smul.u32 2, %s28
        %v365 = vld [vmem:[%s2] sm:$0x1]
        %v366 = vld [vmem:[%s3] sm:$0x1]
        %p367 = scmp.eq.s32.totalorder %s28, 0
        // Predicated region
        $region49: #{triangle_attention_ending_node.1} parent=47 // pred_check
          %p368 = pneg %p367
        $region50: #{triangle_attention_ending_node.1} parent=47 // pred_check_branch
          %370 = sbr.rel (%p368) target = $region52
        $region51: #{triangle_attention_ending_node.1} parent=47 // pred_region
          %v371 = vld [vmem:[%s363] sm:$0xff]
          %v372 = vld [vmem:[%s363 + $0x8] sm:$0xff]
          %373 = vadd.xlane.f32.xlu0 %v371
          %v374 = vpop.xlane.xlu0 %373
          %375 = vadd.xlane.f32.xlu0 %v372
          %v376 = vpop.xlane.xlu0 %375
          %v377 = vrcp.pop 128.0
          %v378 = vmul.f32 128.0, %v377
          %v379 = vsub.f32 1.0, %v378
          %v380 = vmul.f32 %v377, %v379
          %v381 = vadd.f32 %v377, %v380
          %vm382 = vweird.f32 %v377
          %v383 = vsel %vm382, %v377, %v381
          %v384 = vmul.f32 %v374, %v383
          %v385 = vmul.f32 %v376, %v383
          %v386 = vsub.f32 %v371, %v384
          %v387 = vsub.f32 %v372, %v385
          %v388 = vmul.f32 %v386, %v386
          %v389 = vmul.f32 %v387, %v387
          %390 = vadd.xlane.f32.xlu0 %v388
          %v391 = vpop.xlane.xlu0 %390
          %392 = vadd.xlane.f32.xlu0 %v389
          %v393 = vpop.xlane.xlu0 %392
          %v394 = vmul.f32 %v391, %v383
          %v395 = vmul.f32 %v393, %v383
          %v396 = vadd.f32 %v394, 1e-05
          %v397 = vadd.f32 %v395, 1e-05
          %v398 = vrsqrt.pop %v396
          %v399 = vmul.f32 %v398, %v396
          %v400 = vmul.f32 %v399, %v398
          %v401 = vmul.f32 0.5, %v400
          %v402 = vsub.f32 1.5, %v401
          %v403 = vmul.f32 %v398, %v402
          %vm404 = vweird.f32 %v396
          %vm405 = vweird.f32 %v398
          %vm406 = vmor %vm404, %vm405
          %v407 = vsel %vm406, %v398, %v403
          %v408 = vrsqrt.pop %v397
          %v409 = vmul.f32 %v408, %v397
          %v410 = vmul.f32 %v409, %v408
          %v411 = vmul.f32 0.5, %v410
          %v412 = vsub.f32 1.5, %v411
          %v413 = vmul.f32 %v408, %v412
          %vm414 = vweird.f32 %v397
          %vm415 = vweird.f32 %v408
          %vm416 = vmor %vm414, %vm415
          %v417 = vsel %vm416, %v408, %v413
          %v418 = vmul.f32 %v386, %v407
          %v419 = vmul.f32 %v387, %v417
          %v421 = vperm.slane %v365, 0
          %v423 = vmul.f32 %v418, %v421
          %v424 = vmul.f32 %v419, %v421
          %v426 = vperm.slane %v366, 0
          %v428 = vadd.f32 %v423, %v426
          %v429 = vadd.f32 %v424, %v426
          %v430 = vld [vmem:[%s5] sm:$0xff]
          %v431 = vld [vmem:[%s5 + $0x8] sm:$0xff]
          %v432 = vld [vmem:[%s5 + $0x10] sm:$0xff]
          %v433 = vld [vmem:[%s5 + $0x18] sm:$0xff]
          %v434 = vld [vmem:[%s5 + $0x20] sm:$0xff]
          %v435 = vld [vmem:[%s5 + $0x28] sm:$0xff]
          %v436 = vld [vmem:[%s5 + $0x30] sm:$0xff]
          %v437 = vld [vmem:[%s5 + $0x38] sm:$0xff]
          %v438 = vld [vmem:[%s5 + $0x40] sm:$0xff]
          %v439 = vld [vmem:[%s5 + $0x48] sm:$0xff]
          %v440 = vld [vmem:[%s5 + $0x50] sm:$0xff]
          %v441 = vld [vmem:[%s5 + $0x58] sm:$0xff]
          %v442 = vld [vmem:[%s5 + $0x60] sm:$0xff]
          %v443 = vld [vmem:[%s5 + $0x68] sm:$0xff]
          %v444 = vld [vmem:[%s5 + $0x70] sm:$0xff]
          %v445 = vld [vmem:[%s5 + $0x78] sm:$0xff]
          %v446 = vld [vmem:[%s5 + $0x80] sm:$0xff]
          %v447 = vld [vmem:[%s5 + $0x88] sm:$0xff]
          %v448 = vld [vmem:[%s5 + $0x90] sm:$0xff]
          %v449 = vld [vmem:[%s5 + $0x98] sm:$0xff]
          %v450 = vld [vmem:[%s5 + $0xa0] sm:$0xff]
          %v451 = vld [vmem:[%s5 + $0xa8] sm:$0xff]
          %v452 = vld [vmem:[%s5 + $0xb0] sm:$0xff]
          %v453 = vld [vmem:[%s5 + $0xb8] sm:$0xff]
          %v454 = vld [vmem:[%s5 + $0xc0] sm:$0xff]
          %v455 = vld [vmem:[%s5 + $0xc8] sm:$0xff]
          %v456 = vld [vmem:[%s5 + $0xd0] sm:$0xff]
          %v457 = vld [vmem:[%s5 + $0xd8] sm:$0xff]
          %v458 = vld [vmem:[%s5 + $0xe0] sm:$0xff]
          %v459 = vld [vmem:[%s5 + $0xe8] sm:$0xff]
          %v460 = vld [vmem:[%s5 + $0xf0] sm:$0xff]
          %v461 = vld [vmem:[%s5 + $0xf8] sm:$0xff]
          %v462 = vld [vmem:[%s5 + $0x100] sm:$0xff]
          %v463 = vld [vmem:[%s5 + $0x108] sm:$0xff]
          %v464 = vld [vmem:[%s5 + $0x110] sm:$0xff]
          %v465 = vld [vmem:[%s5 + $0x118] sm:$0xff]
          %v466 = vld [vmem:[%s5 + $0x120] sm:$0xff]
          %v467 = vld [vmem:[%s5 + $0x128] sm:$0xff]
          %v468 = vld [vmem:[%s5 + $0x130] sm:$0xff]
          %v469 = vld [vmem:[%s5 + $0x138] sm:$0xff]
          %v470 = vld [vmem:[%s5 + $0x140] sm:$0xff]
          %v471 = vld [vmem:[%s5 + $0x148] sm:$0xff]
          %v472 = vld [vmem:[%s5 + $0x150] sm:$0xff]
          %v473 = vld [vmem:[%s5 + $0x158] sm:$0xff]
          %v474 = vld [vmem:[%s5 + $0x160] sm:$0xff]
          %v475 = vld [vmem:[%s5 + $0x168] sm:$0xff]
          %v476 = vld [vmem:[%s5 + $0x170] sm:$0xff]
          %v477 = vld [vmem:[%s5 + $0x178] sm:$0xff]
          %478 = vmatpush.msra.mxu0 %v475
          %479 = vmatpush.msra.mxu0 %v472
          %480 = vmatpush.msra.mxu0 %v469
          %481 = vmatpush.msra.mxu0 %v466
          %482 = vmatpush.msra.mxu0 %v463
          %483 = vmatpush.msra.mxu0 %v460
          %484 = vmatpush.msra.mxu0 %v457
          %485 = vmatpush.msra.mxu0 %v454
          %486 = vmatpush.msra.mxu0 %v451
          %487 = vmatpush.msra.mxu0 %v448
          %488 = vmatpush.msra.mxu0 %v445
          %489 = vmatpush.msra.mxu0 %v442
          %490 = vmatpush.msra.mxu0 %v439
          %491 = vmatpush.msra.mxu0 %v436
          %492 = vmatpush.msra.mxu0 %v433
          %493 = vmatpush.msra.mxu0 %v430
          %494 = vmatmul.f32.gmra.mxu0 %v428
          %v495 = vpop.f32.mrf.mxu0
          %v496 = vadd.f32 0.0, %v495
          %497 = vmatmul.f32.gmra.mxu0 %v429
          %v498 = vpop.f32.mrf.mxu0
          %v499 = vadd.f32 0.0, %v498
          %500 = vdwg.mxu0
          %501 = vmatpush.msra.mxu0 %v476
          %502 = vmatpush.msra.mxu0 %v473
          %503 = vmatpush.msra.mxu0 %v470
          %504 = vmatpush.msra.mxu0 %v467
          %505 = vmatpush.msra.mxu0 %v464
          %506 = vmatpush.msra.mxu0 %v461
          %507 = vmatpush.msra.mxu0 %v458
          %508 = vmatpush.msra.mxu0 %v455
          %509 = vmatpush.msra.mxu0 %v452
          %510 = vmatpush.msra.mxu0 %v449
          %511 = vmatpush.msra.mxu0 %v446
          %512 = vmatpush.msra.mxu0 %v443
          %513 = vmatpush.msra.mxu0 %v440
          %514 = vmatpush.msra.mxu0 %v437
          %515 = vmatpush.msra.mxu0 %v434
          %516 = vmatpush.msra.mxu0 %v431
          %517 = vmatmul.f32.gmra.mxu0 %v428
          %v518 = vpop.f32.mrf.mxu0
          %v519 = vadd.f32 0.0, %v518
          %520 = vmatmul.f32.gmra.mxu0 %v429
          %v521 = vpop.f32.mrf.mxu0
          %v522 = vadd.f32 0.0, %v521
          %523 = vdwg.mxu0
          %524 = vmatpush.msra.mxu0 %v477
          %525 = vmatpush.msra.mxu0 %v474
          %526 = vmatpush.msra.mxu0 %v471
          %527 = vmatpush.msra.mxu0 %v468
          %528 = vmatpush.msra.mxu0 %v465
          %529 = vmatpush.msra.mxu0 %v462
          %530 = vmatpush.msra.mxu0 %v459
          %531 = vmatpush.msra.mxu0 %v456
          %532 = vmatpush.msra.mxu0 %v453
          %533 = vmatpush.msra.mxu0 %v450
          %534 = vmatpush.msra.mxu0 %v447
          %535 = vmatpush.msra.mxu0 %v444
          %536 = vmatpush.msra.mxu0 %v441
          %537 = vmatpush.msra.mxu0 %v438
          %538 = vmatpush.msra.mxu0 %v435
          %539 = vmatpush.msra.mxu0 %v432
          %540 = vmatmul.f32.gmra.mxu0 %v428
          %v541 = vpop.f32.mrf.mxu0
          %v542 = vadd.f32 0.0, %v541
          %543 = vmatmul.f32.gmra.mxu0 %v429
          %v544 = vpop.f32.mrf.mxu0
          %v545 = vadd.f32 0.0, %v544
          %546 = vdwg.mxu0
          %547 = vst [vmem:[#allocation3] sm:$0xff] %v496
          %548 = vst [vmem:[#allocation3 + $0x8] sm:$0xff] %v499
          %549 = vst [vmem:[#allocation2] sm:$0xff] %v519
          %vm550 = vcmask 31744
          %551 = vst.msk [vmem:[#allocation2 + $0x8] sm:$0xff] %vm550, %v542
          %552 = vst [vmem:[#allocation2 + $0x10] sm:$0xff] %v522
          %553 = vst.msk [vmem:[#allocation2 + $0x18] sm:$0xff] %vm550, %v545
        $region52: #{triangle_attention_ending_node.1} parent=47 // pred_fallthru
          _
        %v554 = vld [vmem:[%s353] sm:$0xff]
        %v555 = vld [vmem:[%s353 + $0x8] sm:$0xff]
        %556 = vadd.xlane.f32.xlu0 %v554
        %v557 = vpop.xlane.xlu0 %556
        %558 = vadd.xlane.f32.xlu0 %v555
        %v559 = vpop.xlane.xlu0 %558
        %v560 = vrcp.pop 128.0
        %v561 = vmul.f32 128.0, %v560
        %v562 = vsub.f32 1.0, %v561
        %v563 = vmul.f32 %v560, %v562
        %v564 = vadd.f32 %v560, %v563
        %vm565 = vweird.f32 %v560
        %v566 = vsel %vm565, %v560, %v564
        %v567 = vmul.f32 %v557, %v566
        %v568 = vmul.f32 %v559, %v566
        %v569 = vsub.f32 %v554, %v567
        %v570 = vsub.f32 %v555, %v568
        %v571 = vmul.f32 %v569, %v569
        %v572 = vmul.f32 %v570, %v570
        %573 = vadd.xlane.f32.xlu0 %v571
        %v574 = vpop.xlane.xlu0 %573
        %575 = vadd.xlane.f32.xlu0 %v572
        %v576 = vpop.xlane.xlu0 %575
        %v577 = vmul.f32 %v574, %v566
        %v578 = vmul.f32 %v576, %v566
        %v579 = vadd.f32 %v577, 1e-05
        %v580 = vadd.f32 %v578, 1e-05
        %v581 = vrsqrt.pop %v579
        %v582 = vmul.f32 %v581, %v579
        %v583 = vmul.f32 %v582, %v581
        %v584 = vmul.f32 0.5, %v583
        %v585 = vsub.f32 1.5, %v584
        %v586 = vmul.f32 %v581, %v585
        %vm587 = vweird.f32 %v579
        %vm588 = vweird.f32 %v581
        %vm589 = vmor %vm587, %vm588
        %v590 = vsel %vm589, %v581, %v586
        %v591 = vrsqrt.pop %v580
        %v592 = vmul.f32 %v591, %v580
        %v593 = vmul.f32 %v592, %v591
        %v594 = vmul.f32 0.5, %v593
        %v595 = vsub.f32 1.5, %v594
        %v596 = vmul.f32 %v591, %v595
        %vm597 = vweird.f32 %v580
        %vm598 = vweird.f32 %v591
        %vm599 = vmor %vm597, %vm598
        %v600 = vsel %vm599, %v591, %v596
        %v601 = vmul.f32 %v569, %v590
        %v602 = vmul.f32 %v570, %v600
        %v604 = vperm.slane %v365, 0
        %v606 = vmul.f32 %v601, %v604
        %v607 = vmul.f32 %v602, %v604
        %v609 = vperm.slane %v366, 0
        %v611 = vadd.f32 %v606, %v609
        %v612 = vadd.f32 %v607, %v609
        %v613 = vld [vmem:[%s4] sm:$0xff]
        %v614 = vld [vmem:[%s4 + $0x8] sm:$0xff]
        %v615 = vld [vmem:[%s4 + $0x10] sm:$0xff]
        %v616 = vld [vmem:[%s4 + $0x18] sm:$0xff]
        %v617 = vld [vmem:[%s4 + $0x20] sm:$0xff]
        %v618 = vld [vmem:[%s4 + $0x28] sm:$0xff]
        %v619 = vld [vmem:[%s4 + $0x30] sm:$0xff]
        %v620 = vld [vmem:[%s4 + $0x38] sm:$0xff]
        %v621 = vld [vmem:[%s4 + $0x40] sm:$0xff]
        %v622 = vld [vmem:[%s4 + $0x48] sm:$0xff]
        %v623 = vld [vmem:[%s4 + $0x50] sm:$0xff]
        %v624 = vld [vmem:[%s4 + $0x58] sm:$0xff]
        %v625 = vld [vmem:[%s4 + $0x60] sm:$0xff]
        %v626 = vld [vmem:[%s4 + $0x68] sm:$0xff]
        %v627 = vld [vmem:[%s4 + $0x70] sm:$0xff]
        %v628 = vld [vmem:[%s4 + $0x78] sm:$0xff]
        %v629 = vld [vmem:[%s4 + $0x80] sm:$0xff]
        %v630 = vld [vmem:[%s4 + $0x88] sm:$0xff]
        %v631 = vld [vmem:[%s4 + $0x90] sm:$0xff]
        %v632 = vld [vmem:[%s4 + $0x98] sm:$0xff]
        %v633 = vld [vmem:[%s4 + $0xa0] sm:$0xff]
        %v634 = vld [vmem:[%s4 + $0xa8] sm:$0xff]
        %v635 = vld [vmem:[%s4 + $0xb0] sm:$0xff]
        %v636 = vld [vmem:[%s4 + $0xb8] sm:$0xff]
        %v637 = vld [vmem:[%s4 + $0xc0] sm:$0xff]
        %v638 = vld [vmem:[%s4 + $0xc8] sm:$0xff]
        %v639 = vld [vmem:[%s4 + $0xd0] sm:$0xff]
        %v640 = vld [vmem:[%s4 + $0xd8] sm:$0xff]
        %v641 = vld [vmem:[%s4 + $0xe0] sm:$0xff]
        %v642 = vld [vmem:[%s4 + $0xe8] sm:$0xff]
        %v643 = vld [vmem:[%s4 + $0xf0] sm:$0xff]
        %v644 = vld [vmem:[%s4 + $0xf8] sm:$0xff]
        %645 = vmatpush.msra.mxu0 %v643
        %646 = vmatpush.msra.mxu0 %v641
        %647 = vmatpush.msra.mxu0 %v639
        %648 = vmatpush.msra.mxu0 %v637
        %649 = vmatpush.msra.mxu0 %v635
        %650 = vmatpush.msra.mxu0 %v633
        %651 = vmatpush.msra.mxu0 %v631
        %652 = vmatpush.msra.mxu0 %v629
        %653 = vmatpush.msra.mxu0 %v627
        %654 = vmatpush.msra.mxu0 %v625
        %655 = vmatpush.msra.mxu0 %v623
        %656 = vmatpush.msra.mxu0 %v621
        %657 = vmatpush.msra.mxu0 %v619
        %658 = vmatpush.msra.mxu0 %v617
        %659 = vmatpush.msra.mxu0 %v615
        %660 = vmatpush.msra.mxu0 %v613
        %661 = vmatmul.f32.gmra.mxu0 %v611
        %v662 = vpop.f32.mrf.mxu0
        %v663 = vadd.f32 0.0, %v662
        %664 = vmatmul.f32.gmra.mxu0 %v612
        %v665 = vpop.f32.mrf.mxu0
        %v666 = vadd.f32 0.0, %v665
        %667 = vdwg.mxu0
        %668 = vmatpush.msra.mxu0 %v644
        %669 = vmatpush.msra.mxu0 %v642
        %670 = vmatpush.msra.mxu0 %v640
        %671 = vmatpush.msra.mxu0 %v638
        %672 = vmatpush.msra.mxu0 %v636
        %673 = vmatpush.msra.mxu0 %v634
        %674 = vmatpush.msra.mxu0 %v632
        %675 = vmatpush.msra.mxu0 %v630
        %676 = vmatpush.msra.mxu0 %v628
        %677 = vmatpush.msra.mxu0 %v626
        %678 = vmatpush.msra.mxu0 %v624
        %679 = vmatpush.msra.mxu0 %v622
        %680 = vmatpush.msra.mxu0 %v620
        %681 = vmatpush.msra.mxu0 %v618
        %682 = vmatpush.msra.mxu0 %v616
        %683 = vmatpush.msra.mxu0 %v614
        %684 = vmatmul.f32.gmra.mxu0 %v611
        %v685 = vpop.f32.mrf.mxu0
        %v686 = vadd.f32 0.0, %v685
        %687 = vmatmul.f32.gmra.mxu0 %v612
        %v688 = vpop.f32.mrf.mxu0
        %v689 = vadd.f32 0.0, %v688
        %690 = vdwg.mxu0
        %v691 = vxor.u32 %v686, 2147483648
        %v692 = vxor.u32 %v689, 2147483648
        %v693 = vmul.f32 %v691, 1.442695
        %v694 = vpow.pop %v693
        %v695 = vmul.f32 %v692, 1.442695
        %v696 = vpow.pop %v695
        %v697 = vadd.f32 %v694, 1.0
        %v698 = vadd.f32 %v696, 1.0
        %v699 = vrcp.pop %v697
        %v700 = vmul.f32 %v697, %v699
        %v701 = vsub.f32 1.0, %v700
        %v702 = vmul.f32 %v699, %v701
        %v703 = vadd.f32 %v699, %v702
        %vm704 = vweird.f32 %v697
        %vm705 = vweird.f32 %v699
        %vm706 = vmor %vm704, %vm705
        %v707 = vsel %vm706, %v699, %v703
        %v708 = vand.u32 2147483647, %v697
        %vm709 = vcmp.eq.f32.partialorder %v708, 8.507059e+37
        %v710 = vand.u32 %v697, 2147483648
        %v711 = vor.u32 1.1754944e-38, %v710
        %v712 = vsel %vm709, %v711, %v707
        %v713 = vmul.f32 1.0, %v712
        %v714 = vrcp.pop %v698
        %v715 = vmul.f32 %v698, %v714
        %v716 = vsub.f32 1.0, %v715
        %v717 = vmul.f32 %v714, %v716
        %v718 = vadd.f32 %v714, %v717
        %vm719 = vweird.f32 %v698
        %vm720 = vweird.f32 %v714
        %vm721 = vmor %vm719, %vm720
        %v722 = vsel %vm721, %v714, %v718
        %v723 = vand.u32 2147483647, %v698
        %vm724 = vcmp.eq.f32.partialorder %v723, 8.507059e+37
        %v725 = vand.u32 %v698, 2147483648
        %v726 = vor.u32 1.1754944e-38, %v725
        %v727 = vsel %vm724, %v726, %v722
        %v728 = vmul.f32 1.0, %v727
        %v729 = vld [vmem:[#allocation2] sm:$0xff]
        %v730 = vld [vmem:[#allocation2 + $0x8] sm:$0xff]
        %v731 = vld [vmem:[#allocation2 + $0x10] sm:$0xff]
        %v732 = vld [vmem:[#allocation2 + $0x18] sm:$0xff]
        %v733 = vld [vmem:[#allocation3] sm:$0xff]
        %v734 = vld [vmem:[#allocation3 + $0x8] sm:$0xff]
        %vm735 = vcmask 261120
        %v736 = vsel %vm735, %v663, 1.0
        %v737 = vsel %vm735, %v666, 1.0
        %vm738 = vcmask 269312
        %v740 = vsel %vm738, %v736, 0
        %v743 = vsel %vm738, %v737, 0
        %v746 = vsel %vm738, %v729, 0
        %v749 = vsel %vm738, %v731, 0
        %751 = vmatpush.xpose.msra.mxu0 0.0
        %752 = vmatpush.xpose.msra.mxu0 0.0
        %753 = vmatpush.xpose.msra.mxu0 0.0
        %754 = vmatpush.xpose.msra.mxu0 0.0
        %755 = vmatpush.xpose.msra.mxu0 0.0
        %756 = vmatpush.xpose.msra.mxu0 0.0
        %757 = vmatpush.xpose.msra.mxu0 0.0
        %758 = vmatpush.xpose.msra.mxu0 0.0
        %759 = vmatpush.xpose.msra.mxu0 0.0
        %760 = vmatpush.xpose.msra.mxu0 0.0
        %761 = vmatpush.xpose.msra.mxu0 0.0
        %762 = vmatpush.xpose.msra.mxu0 0.0
        %763 = vmatpush.xpose.msra.mxu0 0.0
        %764 = vmatpush.xpose.msra.mxu0 0.0
        %765 = vmatpush.xpose.msra.mxu0 %v749
        %766 = vmatpush.xpose.msra.mxu0 %v746
        %767 = vmatmul.f32.gmra.mxu0 %v740
        %v768 = vpop.f32.mrf.mxu0
        %v769 = vadd.f32 0.0, %v768
        %770 = vmatmul.f32.gmra.mxu0 %v743
        %v771 = vpop.f32.mrf.mxu0
        %v772 = vadd.f32 0.0, %v771
        %773 = vdwg.mxu0
        %vm774 = vcmask 130048
        %v775 = vsel %vm774, %v769, -inf
        %776 = vmax.xlane.f32.xlu0 %v775
        %v777 = vpop.xlane.xlu0 %776
        %v778 = vsel %vm774, %v772, -inf
        %779 = vmax.xlane.f32.xlu0 %v778
        %v780 = vpop.xlane.xlu0 %779
        %v781 = vsub.f32 %v769, %v777
        %v782 = vsub.f32 %v772, %v780
        %v783 = vmul.f32 %v781, 1.442695
        %v784 = vpow.pop %v783
        %v785 = vmul.f32 %v782, 1.442695
        %v786 = vpow.pop %v785
        %v787 = vsel %vm774, %v784, 0.0
        %788 = vadd.xlane.f32.xlu0 %v787
        %v789 = vpop.xlane.xlu0 %788
        %v790 = vsel %vm774, %v786, 0.0
        %791 = vadd.xlane.f32.xlu0 %v790
        %v792 = vpop.xlane.xlu0 %791
        %v793 = vrcp.pop %v789
        %v794 = vrcp.pop %v792
        %v795 = vmul.f32 %v784, %v793
        %v796 = vmul.f32 %v786, %v794
        %v798 = vsel %vm774, %v795, 0
        %v801 = vsel %vm774, %v796, 0
        %803 = vmatpush.msra.mxu0 0.0
        %804 = vmatpush.msra.mxu0 0.0
        %805 = vmatpush.msra.mxu0 0.0
        %806 = vmatpush.msra.mxu0 0.0
        %807 = vmatpush.msra.mxu0 0.0
        %808 = vmatpush.msra.mxu0 0.0
        %809 = vmatpush.msra.mxu0 0.0
        %810 = vmatpush.msra.mxu0 0.0
        %811 = vmatpush.msra.mxu0 0.0
        %812 = vmatpush.msra.mxu0 0.0
        %813 = vmatpush.msra.mxu0 0.0
        %814 = vmatpush.msra.mxu0 0.0
        %815 = vmatpush.msra.mxu0 0.0
        %816 = vmatpush.msra.mxu0 0.0
        %817 = vmatpush.msra.mxu0 %v734
        %818 = vmatpush.msra.mxu0 %v733
        %819 = vmatmul.f32.gmra.mxu0 %v798
        %v820 = vpop.f32.mrf.mxu0
        %v821 = vadd.f32 0.0, %v820
        %822 = vmatmul.f32.gmra.mxu0 %v801
        %v823 = vpop.f32.mrf.mxu0
        %v824 = vadd.f32 0.0, %v823
        %825 = vdwg.mxu0
        %v826 = vmul.f32 %v713, %v821
        %v827 = vmul.f32 %v728, %v824
        %830 = vrot.lane.b32.xlu0 %v663, 96
        %v831 = vpop.permute.xlu0 %830
        %832 = vrot.lane.b32.xlu0 %v666, 96
        %v833 = vpop.permute.xlu0 %832
        %v836 = vsel %vm735, %v831, 1.0
        %v837 = vsel %vm735, %v833, 1.0
        %838 = vrot.lane.b32.xlu0 %v729, 95
        %v839 = vpop.permute.xlu0 %838
        %840 = vrot.lane.b32.xlu0 %v731, 95
        %v841 = vpop.permute.xlu0 %840
        %v843 = vsel %vm738, %v836, 0
        %v846 = vsel %vm738, %v837, 0
        %v848 = vsel %vm738, %v839, 0
        %v850 = vsel %vm738, %v841, 0
        %852 = vmatpush.xpose.msra.mxu0 0.0
        %853 = vmatpush.xpose.msra.mxu0 0.0
        %854 = vmatpush.xpose.msra.mxu0 0.0
        %855 = vmatpush.xpose.msra.mxu0 0.0
        %856 = vmatpush.xpose.msra.mxu0 0.0
        %857 = vmatpush.xpose.msra.mxu0 0.0
        %858 = vmatpush.xpose.msra.mxu0 0.0
        %859 = vmatpush.xpose.msra.mxu0 0.0
        %860 = vmatpush.xpose.msra.mxu0 0.0
        %861 = vmatpush.xpose.msra.mxu0 0.0
        %862 = vmatpush.xpose.msra.mxu0 0.0
        %863 = vmatpush.xpose.msra.mxu0 0.0
        %864 = vmatpush.xpose.msra.mxu0 0.0
        %865 = vmatpush.xpose.msra.mxu0 0.0
        %866 = vmatpush.xpose.msra.mxu0 %v850
        %867 = vmatpush.xpose.msra.mxu0 %v848
        %868 = vmatmul.f32.gmra.mxu0 %v843
        %v869 = vpop.f32.mrf.mxu0
        %v870 = vadd.f32 0.0, %v869
        %871 = vmatmul.f32.gmra.mxu0 %v846
        %v872 = vpop.f32.mrf.mxu0
        %v873 = vadd.f32 0.0, %v872
        %874 = vdwg.mxu0
        %v875 = vsel %vm774, %v870, -inf
        %876 = vmax.xlane.f32.xlu0 %v875
        %v877 = vpop.xlane.xlu0 %876
        %v878 = vsel %vm774, %v873, -inf
        %879 = vmax.xlane.f32.xlu0 %v878
        %v880 = vpop.xlane.xlu0 %879
        %v881 = vsub.f32 %v870, %v877
        %v882 = vsub.f32 %v873, %v880
        %v883 = vmul.f32 %v881, 1.442695
        %v884 = vpow.pop %v883
        %v885 = vmul.f32 %v882, 1.442695
        %v886 = vpow.pop %v885
        %v887 = vsel %vm774, %v884, 0.0
        %888 = vadd.xlane.f32.xlu0 %v887
        %v889 = vpop.xlane.xlu0 %888
        %v890 = vsel %vm774, %v886, 0.0
        %891 = vadd.xlane.f32.xlu0 %v890
        %v892 = vpop.xlane.xlu0 %891
        %v893 = vrcp.pop %v889
        %v894 = vrcp.pop %v892
        %v895 = vmul.f32 %v884, %v893
        %v896 = vmul.f32 %v886, %v894
        %899 = vrot.lane.b32.xlu0 %v733, 96
        %v900 = vpop.permute.xlu0 %899
        %901 = vrot.lane.b32.xlu0 %v734, 96
        %v902 = vpop.permute.xlu0 %901
        %v906 = vsel %vm774, %v895, 0
        %v909 = vsel %vm774, %v896, 0
        %911 = vmatpush.msra.mxu0 0.0
        %912 = vmatpush.msra.mxu0 0.0
        %913 = vmatpush.msra.mxu0 0.0
        %914 = vmatpush.msra.mxu0 0.0
        %915 = vmatpush.msra.mxu0 0.0
        %916 = vmatpush.msra.mxu0 0.0
        %917 = vmatpush.msra.mxu0 0.0
        %918 = vmatpush.msra.mxu0 0.0
        %919 = vmatpush.msra.mxu0 0.0
        %920 = vmatpush.msra.mxu0 0.0
        %921 = vmatpush.msra.mxu0 0.0
        %922 = vmatpush.msra.mxu0 0.0
        %923 = vmatpush.msra.mxu0 0.0
        %924 = vmatpush.msra.mxu0 0.0
        %925 = vmatpush.msra.mxu0 %v902
        %926 = vmatpush.msra.mxu0 %v900
        %927 = vmatmul.f32.gmra.mxu0 %v906
        %v928 = vpop.f32.mrf.mxu0
        %v929 = vadd.f32 0.0, %v928
        %930 = vmatmul.f32.gmra.mxu0 %v909
        %v931 = vpop.f32.mrf.mxu0
        %v932 = vadd.f32 0.0, %v931
        %933 = vdwg.mxu0
        %936 = vrot.lane.b32.xlu0 %v929, 32
        %v937 = vpop.permute.xlu0 %936
        %938 = vrot.lane.b32.xlu0 %v932, 32
        %v939 = vpop.permute.xlu0 %938
        %v942 = vmul.f32 %v713, %v937
        %v943 = vmul.f32 %v728, %v939
        %944 = vrot.lane.b32.xlu0 %v663, 64
        %v945 = vpop.permute.xlu0 %944
        %946 = vrot.lane.b32.xlu0 %v666, 64
        %v947 = vpop.permute.xlu0 %946
        %v950 = vsel %vm735, %v945, 1.0
        %v951 = vsel %vm735, %v947, 1.0
        %952 = vrot.lane.b32.xlu0 %v729, 62
        %v953 = vpop.permute.xlu0 %952
        %954 = vrot.lane.b32.xlu0 %v731, 62
        %v955 = vpop.permute.xlu0 %954
        %v957 = vsel %vm738, %v950, 0
        %v960 = vsel %vm738, %v951, 0
        %v962 = vsel %vm738, %v953, 0
        %v964 = vsel %vm738, %v955, 0
        %966 = vmatpush.xpose.msra.mxu0 0.0
        %967 = vmatpush.xpose.msra.mxu0 0.0
        %968 = vmatpush.xpose.msra.mxu0 0.0
        %969 = vmatpush.xpose.msra.mxu0 0.0
        %970 = vmatpush.xpose.msra.mxu0 0.0
        %971 = vmatpush.xpose.msra.mxu0 0.0
        %972 = vmatpush.xpose.msra.mxu0 0.0
        %973 = vmatpush.xpose.msra.mxu0 0.0
        %974 = vmatpush.xpose.msra.mxu0 0.0
        %975 = vmatpush.xpose.msra.mxu0 0.0
        %976 = vmatpush.xpose.msra.mxu0 0.0
        %977 = vmatpush.xpose.msra.mxu0 0.0
        %978 = vmatpush.xpose.msra.mxu0 0.0
        %979 = vmatpush.xpose.msra.mxu0 0.0
        %980 = vmatpush.xpose.msra.mxu0 %v964
        %981 = vmatpush.xpose.msra.mxu0 %v962
        %982 = vmatmul.f32.gmra.mxu0 %v957
        %v983 = vpop.f32.mrf.mxu0
        %v984 = vadd.f32 0.0, %v983
        %985 = vmatmul.f32.gmra.mxu0 %v960
        %v986 = vpop.f32.mrf.mxu0
        %v987 = vadd.f32 0.0, %v986
        %988 = vdwg.mxu0
        %v989 = vsel %vm774, %v984, -inf
        %990 = vmax.xlane.f32.xlu0 %v989
        %v991 = vpop.xlane.xlu0 %990
        %v992 = vsel %vm774, %v987, -inf
        %993 = vmax.xlane.f32.xlu0 %v992
        %v994 = vpop.xlane.xlu0 %993
        %v995 = vsub.f32 %v984, %v991
        %v996 = vsub.f32 %v987, %v994
        %v997 = vmul.f32 %v995, 1.442695
        %v998 = vpow.pop %v997
        %v999 = vmul.f32 %v996, 1.442695
        %v1000 = vpow.pop %v999
        %v1001 = vsel %vm774, %v998, 0.0
        %1002 = vadd.xlane.f32.xlu0 %v1001
        %v1003 = vpop.xlane.xlu0 %1002
        %v1004 = vsel %vm774, %v1000, 0.0
        %1005 = vadd.xlane.f32.xlu0 %v1004
        %v1006 = vpop.xlane.xlu0 %1005
        %v1007 = vrcp.pop %v1003
        %v1008 = vrcp.pop %v1006
        %v1009 = vmul.f32 %v998, %v1007
        %v1010 = vmul.f32 %v1000, %v1008
        %1011 = vrot.lane.b32.xlu0 %v733, 64
        %v1012 = vpop.permute.xlu0 %1011
        %1013 = vrot.lane.b32.xlu0 %v734, 64
        %v1014 = vpop.permute.xlu0 %1013
        %v1018 = vsel %vm774, %v1009, 0
        %v1021 = vsel %vm774, %v1010, 0
        %1023 = vmatpush.msra.mxu0 0.0
        %1024 = vmatpush.msra.mxu0 0.0
        %1025 = vmatpush.msra.mxu0 0.0
        %1026 = vmatpush.msra.mxu0 0.0
        %1027 = vmatpush.msra.mxu0 0.0
        %1028 = vmatpush.msra.mxu0 0.0
        %1029 = vmatpush.msra.mxu0 0.0
        %1030 = vmatpush.msra.mxu0 0.0
        %1031 = vmatpush.msra.mxu0 0.0
        %1032 = vmatpush.msra.mxu0 0.0
        %1033 = vmatpush.msra.mxu0 0.0
        %1034 = vmatpush.msra.mxu0 0.0
        %1035 = vmatpush.msra.mxu0 0.0
        %1036 = vmatpush.msra.mxu0 0.0
        %1037 = vmatpush.msra.mxu0 %v1014
        %1038 = vmatpush.msra.mxu0 %v1012
        %1039 = vmatmul.f32.gmra.mxu0 %v1018
        %v1040 = vpop.f32.mrf.mxu0
        %v1041 = vadd.f32 0.0, %v1040
        %1042 = vmatmul.f32.gmra.mxu0 %v1021
        %v1043 = vpop.f32.mrf.mxu0
        %v1044 = vadd.f32 0.0, %v1043
        %1045 = vdwg.mxu0
        %1048 = vrot.lane.b32.xlu0 %v1041, 64
        %v1049 = vpop.permute.xlu0 %1048
        %1050 = vrot.lane.b32.xlu0 %v1044, 64
        %v1051 = vpop.permute.xlu0 %1050
        %v1054 = vmul.f32 %v713, %v1049
        %v1055 = vmul.f32 %v728, %v1051
        %1056 = vrot.lane.b32.xlu0 %v663, 32
        %v1057 = vpop.permute.xlu0 %1056
        %1058 = vrot.lane.b32.xlu0 %v666, 32
        %v1059 = vpop.permute.xlu0 %1058
        %v1062 = vsel %vm735, %v1057, 1.0
        %v1063 = vsel %vm735, %v1059, 1.0
        %1066 = vrot.lane.b32.xlu0 %v729, 29
        %v1067 = vpop.permute.xlu0 %1066
        %1068 = vrot.lane.b32.xlu0 %v730, 29
        %v1069 = vpop.permute.xlu0 %1068
        %1070 = vrot.lane.b32.xlu0 %v731, 29
        %v1071 = vpop.permute.xlu0 %1070
        %1072 = vrot.lane.b32.xlu0 %v732, 29
        %v1073 = vpop.permute.xlu0 %1072
        %vm1074 = vcmask 236544
        %v1075 = vsel %vm1074, %v1067, %v1069
        %v1076 = vsel %vm1074, %v1071, %v1073
        %v1078 = vsel %vm738, %v1062, 0
        %v1081 = vsel %vm738, %v1063, 0
        %v1083 = vsel %vm738, %v1075, 0
        %v1085 = vsel %vm738, %v1076, 0
        %1087 = vmatpush.xpose.msra.mxu0 0.0
        %1088 = vmatpush.xpose.msra.mxu0 0.0
        %1089 = vmatpush.xpose.msra.mxu0 0.0
        %1090 = vmatpush.xpose.msra.mxu0 0.0
        %1091 = vmatpush.xpose.msra.mxu0 0.0
        %1092 = vmatpush.xpose.msra.mxu0 0.0
        %1093 = vmatpush.xpose.msra.mxu0 0.0
        %1094 = vmatpush.xpose.msra.mxu0 0.0
        %1095 = vmatpush.xpose.msra.mxu0 0.0
        %1096 = vmatpush.xpose.msra.mxu0 0.0
        %1097 = vmatpush.xpose.msra.mxu0 0.0
        %1098 = vmatpush.xpose.msra.mxu0 0.0
        %1099 = vmatpush.xpose.msra.mxu0 0.0
        %1100 = vmatpush.xpose.msra.mxu0 0.0
        %1101 = vmatpush.xpose.msra.mxu0 %v1085
        %1102 = vmatpush.xpose.msra.mxu0 %v1083
        %1103 = vmatmul.f32.gmra.mxu0 %v1078
        %v1104 = vpop.f32.mrf.mxu0
        %v1105 = vadd.f32 0.0, %v1104
        %1106 = vmatmul.f32.gmra.mxu0 %v1081
        %v1107 = vpop.f32.mrf.mxu0
        %v1108 = vadd.f32 0.0, %v1107
        %1109 = vdwg.mxu0
        %v1110 = vsel %vm774, %v1105, -inf
        %1111 = vmax.xlane.f32.xlu0 %v1110
        %v1112 = vpop.xlane.xlu0 %1111
        %v1113 = vsel %vm774, %v1108, -inf
        %1114 = vmax.xlane.f32.xlu0 %v1113
        %v1115 = vpop.xlane.xlu0 %1114
        %v1116 = vsub.f32 %v1105, %v1112
        %v1117 = vsub.f32 %v1108, %v1115
        %v1118 = vmul.f32 %v1116, 1.442695
        %v1119 = vpow.pop %v1118
        %v1120 = vmul.f32 %v1117, 1.442695
        %v1121 = vpow.pop %v1120
        %v1122 = vsel %vm774, %v1119, 0.0
        %1123 = vadd.xlane.f32.xlu0 %v1122
        %v1124 = vpop.xlane.xlu0 %1123
        %v1125 = vsel %vm774, %v1121, 0.0
        %1126 = vadd.xlane.f32.xlu0 %v1125
        %v1127 = vpop.xlane.xlu0 %1126
        %v1128 = vrcp.pop %v1124
        %v1129 = vrcp.pop %v1127
        %v1130 = vmul.f32 %v1119, %v1128
        %v1131 = vmul.f32 %v1121, %v1129
        %1132 = vrot.lane.b32.xlu0 %v733, 32
        %v1133 = vpop.permute.xlu0 %1132
        %1134 = vrot.lane.b32.xlu0 %v734, 32
        %v1135 = vpop.permute.xlu0 %1134
        %v1139 = vsel %vm774, %v1130, 0
        %v1142 = vsel %vm774, %v1131, 0
        %1144 = vmatpush.msra.mxu0 0.0
        %1145 = vmatpush.msra.mxu0 0.0
        %1146 = vmatpush.msra.mxu0 0.0
        %1147 = vmatpush.msra.mxu0 0.0
        %1148 = vmatpush.msra.mxu0 0.0
        %1149 = vmatpush.msra.mxu0 0.0
        %1150 = vmatpush.msra.mxu0 0.0
        %1151 = vmatpush.msra.mxu0 0.0
        %1152 = vmatpush.msra.mxu0 0.0
        %1153 = vmatpush.msra.mxu0 0.0
        %1154 = vmatpush.msra.mxu0 0.0
        %1155 = vmatpush.msra.mxu0 0.0
        %1156 = vmatpush.msra.mxu0 0.0
        %1157 = vmatpush.msra.mxu0 0.0
        %1158 = vmatpush.msra.mxu0 %v1135
        %1159 = vmatpush.msra.mxu0 %v1133
        %1160 = vmatmul.f32.gmra.mxu0 %v1139
        %v1161 = vpop.f32.mrf.mxu0
        %v1162 = vadd.f32 0.0, %v1161
        %1163 = vmatmul.f32.gmra.mxu0 %v1142
        %v1164 = vpop.f32.mrf.mxu0
        %v1165 = vadd.f32 0.0, %v1164
        %1166 = vdwg.mxu0
        %1169 = vrot.lane.b32.xlu0 %v1162, 96
        %v1170 = vpop.permute.xlu0 %1169
        %1171 = vrot.lane.b32.xlu0 %v1165, 96
        %v1172 = vpop.permute.xlu0 %1171
        %v1175 = vmul.f32 %v713, %v1170
        %v1176 = vmul.f32 %v728, %v1172
        %v1177 = vsel %vm735, %v826, %v942
        %v1178 = vsel %vm735, %v827, %v943
        %vm1179 = vcmask 523264
        %v1180 = vsel %vm1179, %v1177, %v1054
        %v1181 = vsel %vm1179, %v1178, %v1055
        %vm1182 = vcmask 785408
        %v1183 = vsel %vm1182, %v1180, %v1175
        %v1184 = vsel %vm1182, %v1181, %v1176
        %v1185 = vld [vmem:[%s6] sm:$0xff]
        %v1186 = vld [vmem:[%s6 + $0x8] sm:$0xff]
        %v1187 = vld [vmem:[%s6 + $0x10] sm:$0xff]
        %v1188 = vld [vmem:[%s6 + $0x18] sm:$0xff]
        %v1189 = vld [vmem:[%s6 + $0x20] sm:$0xff]
        %v1190 = vld [vmem:[%s6 + $0x28] sm:$0xff]
        %v1191 = vld [vmem:[%s6 + $0x30] sm:$0xff]
        %v1192 = vld [vmem:[%s6 + $0x38] sm:$0xff]
        %v1193 = vld [vmem:[%s6 + $0x40] sm:$0xff]
        %v1194 = vld [vmem:[%s6 + $0x48] sm:$0xff]
        %v1195 = vld [vmem:[%s6 + $0x50] sm:$0xff]
        %v1196 = vld [vmem:[%s6 + $0x58] sm:$0xff]
        %v1197 = vld [vmem:[%s6 + $0x60] sm:$0xff]
        %v1198 = vld [vmem:[%s6 + $0x68] sm:$0xff]
        %v1199 = vld [vmem:[%s6 + $0x70] sm:$0xff]
        %v1200 = vld [vmem:[%s6 + $0x78] sm:$0xff]
        %1201 = vmatpush.msra.mxu0 %v1200
        %1202 = vmatpush.msra.mxu0 %v1199
        %1203 = vmatpush.msra.mxu0 %v1198
        %1204 = vmatpush.msra.mxu0 %v1197
        %1205 = vmatpush.msra.mxu0 %v1196
        %1206 = vmatpush.msra.mxu0 %v1195
        %1207 = vmatpush.msra.mxu0 %v1194
        %1208 = vmatpush.msra.mxu0 %v1193
        %1209 = vmatpush.msra.mxu0 %v1192
        %1210 = vmatpush.msra.mxu0 %v1191
        %1211 = vmatpush.msra.mxu0 %v1190
        %1212 = vmatpush.msra.mxu0 %v1189
        %1213 = vmatpush.msra.mxu0 %v1188
        %1214 = vmatpush.msra.mxu0 %v1187
        %1215 = vmatpush.msra.mxu0 %v1186
        %1216 = vmatpush.msra.mxu0 %v1185
        %1217 = vmatmul.f32.gmra.mxu0 %v1183
        %v1218 = vpop.f32.mrf.mxu0
        %v1219 = vadd.f32 0.0, %v1218
        %1220 = vmatmul.f32.gmra.mxu0 %v1184
        %v1221 = vpop.f32.mrf.mxu0
        %v1222 = vadd.f32 0.0, %v1221
        %1223 = vdwg.mxu0
        %1224 = vst [vmem:[%s340] sm:$0xff] %v1219
        %1225 = vst [vmem:[%s340 + $0x8] sm:$0xff] %v1222
        %s1226 = sand.u32 %s215, 1
        %s1227 = scalar_lea.sflag [#allocation5], %s1226
        %s1228 = sand.u32 %s215, 1
        %s1229 = smul.addr %s1228, 16
        %s1230 = scalar_lea.vmem [#allocation4], %s1229
        // Predicated region
        $region53: #{triangle_attention_ending_node.1} parent=47 // pred_check
          %p1231 = pneg %p225
        $region54: #{triangle_attention_ending_node.1} parent=47 // pred_check_branch
          %1233 = sbr.rel (%p1231) target = $region56
        $region55: #{triangle_attention_ending_node.1} parent=47 // pred_region
          %s1234 = smul.u32 2, %s28
          %1236 = vsyncadd %s1227, 0
          %s1237 = smul.addr %s27, 2
          %s1238 = sadd.s32 %s1234, %s1237
          %s1239 = smul.addr %s26, 32
          %s1240 = sadd.s32 %s1238, %s1239
          %s1241 = smul.addr %s1240, 8
          %s1242 = scalar_lea.hbm %s7, %s1241
          %s1243 = sshll.u32 %s1230, 4
          %s1244 = int_to_ptr.vmem [resolvable:$true] %s1243
          %s1245 = sshll.u32 %s1242, 4
          %s1246 = int_to_ptr.hbm [resolvable:$true] %s1245
          %1251 = dma.vmem_to_hbm [thread:$0]  %s1244, 256, %s1246, %s1227, 128, 128, 8
        $region56: #{triangle_attention_ending_node.1} parent=47 // pred_fallthru
          _
      $region48: #{triangle_attention_ending_node.1} parent=5 // pred_fallthru
        _
      %p1252 = scmp.le.s32.totalorder 2, %s16
      // Predicated region
      $region57: #{triangle_attention_ending_node.1} parent=5 // pred_check
        %p1253 = pneg %p1252
      $region58: #{triangle_attention_ending_node.1} parent=5 // pred_check_branch
        %1255 = sbr.rel (%p1253) target = $region60
      $region59: #{triangle_attention_ending_node.1} parent=5 // pred_region
        %s1256 = ssub.s32 %s16, 2
        // Predicated region
        $region61: #{triangle_attention_ending_node.1} parent=59 // pred_check
          %p1257 = pneg %p231
        $region62: #{triangle_attention_ending_node.1} parent=59 // pred_check_branch
          %1259 = sbr.rel (%p1257) target = $region64
        $region63: #{triangle_attention_ending_node.1} parent=59 // pred_region
          %s1260 = sand.u32 %s216, 1
          %s1261 = scalar_lea.sflag [#allocation5], %s1260
          %s1262 = sand.u32 %s216, 1
          %s1263 = smul.addr %s1262, 16
          %s1264 = scalar_lea.vmem [#allocation4], %s1263
          %1266 = dma.done %s1261, 256
        $region64: #{triangle_attention_ending_node.1} parent=59 // pred_fallthru
          _
      $region60: #{triangle_attention_ending_node.1} parent=5 // pred_fallthru
        _
    $region6: #{triangle_attention_ending_node.1} parent=1 // loop_footer
      %s20 = sadd.s32 1, %s16
    $region7: #{triangle_attention_ending_node.1} parent=1 // loop_footer_branch
      %15 = sbr.rel target = $region3
    $region8: #{triangle_attention_ending_node.1} parent=1 // loop_exit
      _
    %1267 = vsyncpa [#allocation5], 1
    %s1268 = scalar_lea.sflag [#allocation5], 1
    %1269 = vsyncpa %s1268, 1

</llo_original>
